<compile_context>
chip_gen: v5e
topology: v5e:2x2
jax: 0.10.0
libtpu: 0.0.40
codegen_flags: <defaults>
</compile_context>

<pallas_src>
import functools

import jax
import jax.numpy as jnp
from jax.experimental import pallas as pl
from jax.experimental.pallas import tpu as pltpu


# ---------------------------------------------------------------------------
# Phase A kernels: accumulate per-metapath sums of tanh(z @ W1 + b1) over N.
# ---------------------------------------------------------------------------
def _phase_a_sublane_kernel(zf_ref, w1_ref, b1_ref, part_ref):
    """part[0, k, :] += sum_{rows r in tile with r % 8 == k} tanh(z[r] @ W1 + b1)."""
    @pl.when(pl.program_id(1) == 0)
    def _init():
        part_ref[...] = jnp.zeros_like(part_ref)

    proj = jnp.tanh(
        jnp.dot(zf_ref[...], w1_ref[...], preferred_element_type=jnp.float32)
        + b1_ref[...]
    )                                                       # (TN*M, H) f32
    # Layout-preserving sublane reduction: splitting the leading dim keeps the
    # native (8, 128) vreg tiling, and the axis-0 sum is plain VALU vreg adds
    # (no MXU, no iota/compare work per grid step).
    hdim = proj.shape[-1]
    part = proj.reshape(-1, 8, hdim).sum(axis=0)            # (8, H)
    part_ref[...] += part[None, :, :]


def _phase_a_pool_kernel(zf_ref, w1_ref, b1_ref, pool_ref, g_ref):
    """Fallback (M does not divide 8): G[m, :] += sum_{r % M == m} tanh(...)."""
    @pl.when(pl.program_id(1) == 0)
    def _init():
        g_ref[...] = jnp.zeros_like(g_ref)

    proj = jnp.tanh(
        jnp.dot(zf_ref[...], w1_ref[...], preferred_element_type=jnp.float32)
        + b1_ref[...]
    )
    # pool is a resident constant input (DMA'd once via a constant index_map),
    # not rebuilt with iota/mod/compare every grid iteration.
    g_ref[...] += jnp.dot(pool_ref[...], proj,
                          preferred_element_type=jnp.float32)[None, :, :]


# ---------------------------------------------------------------------------
# Phase B kernel: out[n, :] = sum_m beta[m] * z[n, m, :]
# ---------------------------------------------------------------------------
def _phase_b_kernel(beta_ref, zf_ref, out_ref):
    tn = out_ref.shape[0]
    m = beta_ref.shape[0]
    # Strided sublane loads pick every M-th row (one metapath) of the flat
    # (TN*M, D) tile -> (TN, D) lane slabs; beta[m] is a cheap SMEM scalar.
    acc = beta_ref[0] * zf_ref[pl.ds(0, tn, stride=m), :]
    for j in range(1, m):
        acc = acc + beta_ref[j] * zf_ref[pl.ds(j, tn, stride=m), :]
    out_ref[...] = acc.astype(out_ref.dtype)


# ---------------------------------------------------------------------------
# Wrapper
# ---------------------------------------------------------------------------
def _pick_tile_n(n, m, d, hdim, in_itemsize, budget_bytes=10 << 20):
    """Largest node tile dividing N whose Phase-A working set fits the budget
    (budget chosen to sit under the default scoped-VMEM limit on v5e/v6e/v7x)."""
    def est(t):
        zf_tile = 2 * t * m * d * in_itemsize        # double-buffered input tile
        proj = t * m * hdim * 4                      # f32 projection intermediate
        weights = 2 * d * hdim * in_itemsize + 2 * hdim * 4
        return zf_tile + proj + weights + (1 << 16)  # slack for accum/output bufs

    for t in (1024, 512, 256, 128, 64, 32, 16, 8):
        if n % t == 0 and est(t) <= budget_bytes:
            return t
    # Bounded fallback: largest divisor of N (<= 1024) that fits the budget.
    best = 1
    for t in range(2, min(n, 1024) + 1):
        if n % t == 0 and est(t) <= budget_bytes:
            best = t
    return best


def semantic_attention(z, w1, b1, w2, *, tile_n=None, use_bf16=False):
    """z: (N, M, D); w1: (D, H); b1: (1, H); w2: (1, H).

    Returns (out_emb (N, D), att_mp (M,)), matching SemanticAttention.forward.
    use_bf16=True streams z / W1 to the Phase-A projection in bf16 (f32
    accumulate) — a large MXU/EUP/DMA win on v6e/v7x at ~1e-3-level accuracy.
    """
    n, m, d = z.shape
    hdim = w1.shape[1]

    in_itemsize = 2 if use_bf16 else 4
    a_dtype = jnp.bfloat16 if use_bf16 else jnp.float32

    tn = _pick_tile_n(n, m, d, hdim, in_itemsize) if tile_n is None else tile_n
    assert n % tn == 0, "tile_n must divide N"
    grid_n = n // tn

    # Free row-major reshape in HBM; no in-kernel relayout needed.
    zf = z.reshape(n * m, d)
    zf_a = zf.astype(a_dtype)
    w1_a = w1.astype(a_dtype)
    b1_f = b1.astype(jnp.float32)

    # Split the Phase-A reduction across TensorCores when the step count allows
    # (up to ~2x on v7x's two TCs; harmless serial loop on 1-TC v5e/v6e).
    ncs = 2 if (grid_n % 2 == 0 and grid_n >= 2) else 1
    steps = grid_n // ncs

    cost_a = pl.CostEstimate(
        flops=2 * n * m * d * hdim,
        transcendentals=n * m * hdim,
        bytes_accessed=(n * m * d * in_itemsize + d * hdim * in_itemsize
                        + hdim * 4 + ncs * 8 * hdim * 4),
    )
    a_in_specs = [
        pl.BlockSpec((tn * m, d), lambda c, i: (c * steps + i, 0)),
        pl.BlockSpec((d, hdim), lambda c, i: (0, 0)),
        pl.BlockSpec((1, hdim), lambda c, i: (0, 0)),
    ]
    a_params = pltpu.CompilerParams(
        dimension_semantics=("parallel", "arbitrary"))

    use_sublane = (m <= 8) and (8 % m == 0) and ((tn * m) % 8 == 0)

    if use_sublane:
        partials = pl.pallas_call(
            _phase_a_sublane_kernel,
            out_shape=jax.ShapeDtypeStruct((ncs, 8, hdim), jnp.float32),
            grid=(ncs, steps),
            in_specs=a_in_specs,
            out_specs=pl.BlockSpec((1, 8, hdim), lambda c, i: (c, 0, 0)),
            compiler_params=a_params,
            cost_estimate=cost_a,
        )(zf_a, w1_a, b1_f)
        # Fold sublane phase k -> metapath k % M (tiny, once, in JAX glue).
        part8 = partials.sum(axis=0)                          # (8, H)
        g_sum = part8.reshape(8 // m, m, hdim).sum(axis=0)    # (M, H)
    else:
        # Fallback for M not dividing 8: hoisted pooling mask, DMA'd once.
        r = jnp.arange(tn * m, dtype=jnp.int32)
        pool = (r[None, :] % m == jnp.arange(m, dtype=jnp.int32)[:, None])
        pool = pool.astype(jnp.float32)                       # (M, TN*M) resident
        partials = pl.pallas_call(
            _phase_a_pool_kernel,
            out_shape=jax.ShapeDtypeStruct((ncs, m, hdim), jnp.float32),
            grid=(ncs, steps),
            in_specs=a_in_specs + [pl.BlockSpec((m, tn * m), lambda c, i: (0, 0))],
            out_specs=pl.BlockSpec((1, m, hdim), lambda c, i: (c, 0, 0)),
            compiler_params=a_params,
            cost_estimate=cost_a,
        )(zf_a, w1_a, b1_f, pool)
        g_sum = partials.sum(axis=0)                          # (M, H)

    # ---- Tiny (M-element) logits + softmax in plain JAX ----
    # s[n, m] = sum_h tanh(.)[n, m, h] * w2[h]; logits = mean_n s (linearity).
    w_logits = jnp.sum(g_sum * w2.astype(jnp.float32), axis=-1) / jnp.float32(n)
    beta = jax.nn.softmax(w_logits).astype(jnp.float32)       # (M,)

    # ---- Phase B: beta-weighted mixture of metapath embeddings ----
    cost_b = pl.CostEstimate(
        flops=2 * n * m * d,
        transcendentals=0,
        bytes_accessed=n * m * d * 4 + n * d * int(z.dtype.itemsize) + m * 4,
    )
    out_emb = pl.pallas_call(
        _phase_b_kernel,
        out_shape=jax.ShapeDtypeStruct((n, d), z.dtype),
        grid=(grid_n,),
        in_specs=[
            pl.BlockSpec(memory_space=pltpu.MemorySpace.SMEM),   # beta (M,) scalars
            pl.BlockSpec((tn * m, d), lambda i: (i, 0)),
        ],
        out_specs=pl.BlockSpec((tn, d), lambda i: (i, 0)),
        compiler_params=pltpu.CompilerParams(
            dimension_semantics=("parallel",)),   # independent tiles (megacore)
        cost_estimate=cost_b,
    )(beta, zf)

    return out_emb, beta


def reference(z, w1, b1, w2):
    """Pure-JAX reference mirroring the PyTorch forward exactly."""
    hp = jax.lax.Precision.HIGHEST
    h = jnp.tanh(jnp.einsum('nmd,dh->nmh', z, w1, precision=hp) + b1.reshape(1, 1, -1))
    s = jnp.einsum('nmh,h->nm', h, w2[0], precision=hp)[..., None]  # (N, M, 1)
    w = s.mean(0)                                                    # (M, 1)
    beta = jax.nn.softmax(w, axis=0)                                 # (M, 1)
    out_emb = (beta[None] * z).sum(1)                                # (N, D)
    att_mp = beta[:, 0]                                              # (M,)
    return out_emb, att_mp


if __name__ == "__main__":
    # N nodes, M metapaths, D = in_size, H = hidden_size (module default 128)
    N, M, D, H = 512, 4, 64, 128
    key = jax.random.PRNGKey(0)
    kz, k1, kb, k2 = jax.random.split(key, 4)
    z = jax.random.normal(kz, (N, M, D), dtype=jnp.float32)
    w1 = jax.random.normal(k1, (D, H), dtype=jnp.float32) * 0.1
    b1 = jax.random.normal(kb, (1, H), dtype=jnp.float32) * 0.1
    w2 = jax.random.normal(k2, (1, H), dtype=jnp.float32) * 0.1

    ref_out, ref_att = reference(z, w1, b1, w2)

    # f32 path (default): must match the reference at 1e-4.
    fwd = jax.jit(semantic_attention)
    out_emb, att_mp = jax.block_until_ready(fwd(z, w1, b1, w2))
    assert out_emb.shape == (N, D) and att_mp.shape == (M,)
    assert jnp.allclose(out_emb, ref_out, atol=1e-4, rtol=1e-4)
    assert jnp.allclose(att_mp, ref_att, atol=1e-4, rtol=1e-4)

    # bf16 Phase-A projection path (v6e/v7x MXU/EUP/DMA win), looser tolerance.
    fwd_bf16 = jax.jit(functools.partial(semantic_attention, use_bf16=True))
    out_bf16, att_bf16 = jax.block_until_ready(fwd_bf16(z, w1, b1, w2))
    assert jnp.allclose(out_bf16, ref_out, atol=5e-2, rtol=5e-2)
    assert jnp.allclose(att_bf16, ref_att, atol=5e-2, rtol=5e-2)

    print("KERNEL_OK")
</pallas_src>

<mosaic_0001>
module attributes {stable_mosaic.version = 11 : i64} {
  func.func @_phase_a_sublane_kernel(%arg0: i32, %arg1: i32, %arg2: memref<2048x64xf32, #tpu.memory_space<vmem>>, %arg3: memref<64x128xf32, #tpu.memory_space<vmem>>, %arg4: memref<1x128xf32, #tpu.memory_space<vmem>>, %arg5: memref<1x8x128xf32, #tpu.memory_space<vmem>>) attributes {dimension_semantics = [#tpu.dimension_semantics<parallel>, #tpu.dimension_semantics<arbitrary>], iteration_bounds = array<i64: 1, 1>, scalar_prefetch = 0 : i64, scratch_operands = 0 : i64, tpu.core_type = #tpu.core_type<tc>, window_params = [{transform_indices = @transform_0, window_bounds = array<i64: 2048, 64>}, {pipeline_mode = #tpu.pipeline_mode<synchronous>, transform_indices = @transform_1, window_bounds = array<i64: 64, 128>}, {pipeline_mode = #tpu.pipeline_mode<synchronous>, transform_indices = @transform_2, window_bounds = array<i64: 1, 128>}, {transform_indices = @transform_3, window_bounds = array<i64: 1, 8, 128>}]} {
    %c0_i32 = arith.constant 0 : i32
    %0 = arith.cmpi eq, %arg1, %c0_i32 : i32
    %1 = arith.extui %0 : i1 to i32
    %c0_i32_0 = arith.constant 0 : i32
    %2 = arith.cmpi ne, %1, %c0_i32_0 : i32
    scf.if %2 {
      %cst_13 = arith.constant 0.000000e+00 : f32
      %16 = vector.broadcast %cst_13 : f32 to vector<1x8x128xf32>
      %c0_14 = arith.constant 0 : index
      %c0_15 = arith.constant 0 : index
      %c0_16 = arith.constant 0 : index
      %17 = vector.load %arg5[%c0_14, %c0_15, %c0_16] : memref<1x8x128xf32, #tpu.memory_space<vmem>>, vector<1x8x128xf32>
      tpu.vector_store %arg5[%c0_14, %c0_15, %c0_16], %16 {strides = array<i32>} : memref<1x8x128xf32, #tpu.memory_space<vmem>>, vector<1x8x128xf32>,
    } else {
    }
    %c0 = arith.constant 0 : index
    %c0_1 = arith.constant 0 : index
    %3 = vector.load %arg2[%c0, %c0_1] : memref<2048x64xf32, #tpu.memory_space<vmem>>, vector<2048x64xf32>
    %c0_2 = arith.constant 0 : index
    %c0_3 = arith.constant 0 : index
    %4 = vector.load %arg3[%c0_2, %c0_3] : memref<64x128xf32, #tpu.memory_space<vmem>>, vector<64x128xf32>
    %cst = arith.constant dense<0.000000e+00> : vector<2048x128xf32>
    %5 = tpu.matmul %3, %4, %cst {dimension_numbers = #tpu.dot_dimension_numbers<[1], [0], [0], [1], [0, 0, 1, 1], [], []>} : vector<2048x64xf32>, vector<64x128xf32>, vector<2048x128xf32> -> vector<2048x128xf32>
    %c0_4 = arith.constant 0 : index
    %c0_5 = arith.constant 0 : index
    %6 = vector.load %arg4[%c0_4, %c0_5] : memref<1x128xf32, #tpu.memory_space<vmem>>, vector<1x128xf32>
    %7 = vector.broadcast %6 : vector<1x128xf32> to vector<2048x128xf32>
    %8 = arith.addf %5, %7 : vector<2048x128xf32>
    %9 = math.tanh %8 : vector<2048x128xf32>
    %10 = vector.shape_cast %9 : vector<2048x128xf32> to vector<256x8x128xf32>
    %cst_6 = arith.constant dense<0.000000e+00> : vector<8x128xf32>
    %11 = vector.multi_reduction <add>, %10, %cst_6 [0] : vector<256x8x128xf32> to vector<8x128xf32>
    %c0_7 = arith.constant 0 : index
    %c0_8 = arith.constant 0 : index
    %c0_9 = arith.constant 0 : index
    %12 = vector.load %arg5[%c0_7, %c0_8, %c0_9] : memref<1x8x128xf32, #tpu.memory_space<vmem>>, vector<1x8x128xf32>
    %13 = vector.shape_cast %11 : vector<8x128xf32> to vector<1x8x128xf32>
    %14 = arith.addf %12, %13 : vector<1x8x128xf32>
    %c0_10 = arith.constant 0 : index
    %c0_11 = arith.constant 0 : index
    %c0_12 = arith.constant 0 : index
    %15 = vector.load %arg5[%c0_10, %c0_11, %c0_12] : memref<1x8x128xf32, #tpu.memory_space<vmem>>, vector<1x8x128xf32>
    tpu.vector_store %arg5[%c0_10, %c0_11, %c0_12], %14 {strides = array<i32>} : memref<1x8x128xf32, #tpu.memory_space<vmem>>, vector<1x8x128xf32>,
    return
  }
  func.func @transform_0(%arg0: i32, %arg1: i32) -> (i32, i32) {
    %c1_i32 = arith.constant 1 : i32
    %0 = arith.muli %arg0, %c1_i32 : i32
    %1 = arith.addi %0, %arg1 : i32
    %c0_i32 = arith.constant 0 : i32
    %c0_i32_0 = arith.constant 0 : i32
    return %1, %c0_i32 : i32, i32
  }
  func.func @transform_1(%arg0: i32, %arg1: i32) -> (i32, i32) {
    %c0_i32 = arith.constant 0 : i32
    %c0_i32_0 = arith.constant 0 : i32
    %c0_i32_1 = arith.constant 0 : i32
    return %c0_i32, %c0_i32_0 : i32, i32
  }
  func.func @transform_2(%arg0: i32, %arg1: i32) -> (i32, i32) {
    %c0_i32 = arith.constant 0 : i32
    %c0_i32_0 = arith.constant 0 : i32
    %c0_i32_1 = arith.constant 0 : i32
    return %c0_i32, %c0_i32_0 : i32, i32
  }
  func.func @transform_3(%arg0: i32, %arg1: i32) -> (i32, i32, i32) {
    %c0_i32 = arith.constant 0 : i32
    %c0_i32_0 = arith.constant 0 : i32
    %c0_i32_1 = arith.constant 0 : i32
    return %arg0, %c0_i32, %c0_i32_0 : i32, i32, i32
  }
}

module attributes {stable_mosaic.version = 11 : i64} {
  func.func @_phase_b_kernel(%arg0: i32, %arg1: memref<4xf32, #tpu.memory_space<smem>>, %arg2: memref<2048x64xf32, #tpu.memory_space<vmem>>, %arg3: memref<512x64xf32, #tpu.memory_space<vmem>>) attributes {dimension_semantics = [#tpu.dimension_semantics<parallel>], iteration_bounds = array<i64: 1>, scalar_prefetch = 0 : i64, scratch_operands = 0 : i64, tpu.core_type = #tpu.core_type<tc>, window_params = [{transform_indices = @transform_0, window_bounds = array<i64: 4>}, {transform_indices = @transform_1, window_bounds = array<i64: 2048, 64>}, {transform_indices = @transform_2, window_bounds = array<i64: 512, 64>}]} {
    %c0 = arith.constant 0 : index
    %0 = memref.load %arg1[%c0] : memref<4xf32, #tpu.memory_space<smem>>
    %c0_0 = arith.constant 0 : index
    %c0_1 = arith.constant 0 : index
    %1 = tpu.strided_load %arg2[%c0_0, %c0_1] {strides = array<i32: 4, 1>} : memref<2048x64xf32, #tpu.memory_space<vmem>>, vector<512x64xf32>
    %2 = vector.broadcast %0 : f32 to vector<512x64xf32>
    %3 = arith.mulf %2, %1 : vector<512x64xf32>
    %c1 = arith.constant 1 : index
    %4 = memref.load %arg1[%c1] : memref<4xf32, #tpu.memory_space<smem>>
    %c1_2 = arith.constant 1 : index
    %c0_3 = arith.constant 0 : index
    %5 = tpu.strided_load %arg2[%c1_2, %c0_3] {strides = array<i32: 4, 1>} : memref<2048x64xf32, #tpu.memory_space<vmem>>, vector<512x64xf32>
    %6 = vector.broadcast %4 : f32 to vector<512x64xf32>
    %7 = arith.mulf %6, %5 : vector<512x64xf32>
    %8 = arith.addf %3, %7 : vector<512x64xf32>
    %c2 = arith.constant 2 : index
    %9 = memref.load %arg1[%c2] : memref<4xf32, #tpu.memory_space<smem>>
    %c2_4 = arith.constant 2 : index
    %c0_5 = arith.constant 0 : index
    %10 = tpu.strided_load %arg2[%c2_4, %c0_5] {strides = array<i32: 4, 1>} : memref<2048x64xf32, #tpu.memory_space<vmem>>, vector<512x64xf32>
    %11 = vector.broadcast %9 : f32 to vector<512x64xf32>
    %12 = arith.mulf %11, %10 : vector<512x64xf32>
    %13 = arith.addf %8, %12 : vector<512x64xf32>
    %c3 = arith.constant 3 : index
    %14 = memref.load %arg1[%c3] : memref<4xf32, #tpu.memory_space<smem>>
    %c3_6 = arith.constant 3 : index
    %c0_7 = arith.constant 0 : index
    %15 = tpu.strided_load %arg2[%c3_6, %c0_7] {strides = array<i32: 4, 1>} : memref<2048x64xf32, #tpu.memory_space<vmem>>, vector<512x64xf32>
    %16 = vector.broadcast %14 : f32 to vector<512x64xf32>
    %17 = arith.mulf %16, %15 : vector<512x64xf32>
    %18 = arith.addf %13, %17 : vector<512x64xf32>
    %c0_8 = arith.constant 0 : index
    %c0_9 = arith.constant 0 : index
    %19 = vector.load %arg3[%c0_8, %c0_9] : memref<512x64xf32, #tpu.memory_space<vmem>>, vector<512x64xf32>
    tpu.vector_store %arg3[%c0_8, %c0_9], %18 {strides = array<i32>} : memref<512x64xf32, #tpu.memory_space<vmem>>, vector<512x64xf32>,
    return
  }
  func.func @transform_0(%arg0: i32) -> i32 {
    %c0_i32 = arith.constant 0 : i32
    %c0_i32_0 = arith.constant 0 : i32
    return %c0_i32 : i32
  }
  func.func @transform_1(%arg0: i32) -> (i32, i32) {
    %c0_i32 = arith.constant 0 : i32
    %c0_i32_0 = arith.constant 0 : i32
    return %arg0, %c0_i32 : i32, i32
  }
  func.func @transform_2(%arg0: i32) -> (i32, i32) {
    %c0_i32 = arith.constant 0 : i32
    %c0_i32_0 = arith.constant 0 : i32
    return %arg0, %c0_i32 : i32, i32
  }
}

</mosaic_0001>

<llo_original>
// kernel: semantic_attention.3
$region0: #{semantic_attention.3}
  #allocation0 [shape = 'u32[]', space=smem, size = 0x4, offset = 0x4, fixed_abs, tag = 'smem constant byte address 0x4 - core index']
  #allocation1 [shape = 'u32[72,128]{1,0:T(1,128)}', space=vmem, size = 0x9000, scoped, tag = 'internal scratch']
  %s0 = inlined_call_operand.vmem [shape: f32[4], index: 0, kind: input, shape index: {}]
  %s1 = inlined_call_operand.vmem [shape: f32[2048,64], index: 1, kind: input, shape index: {}]
  %s2 = inlined_call_operand.vmem [shape: f32[512,64], index: 2, kind: output, shape index: {}]
  %s3 = sld [smem:[#allocation0]]
  $region22: #{semantic_attention.3} parent=0
    _
  %s5 = ssub.s32 1, %s3
  %s6 = scalar_select 0, %s5, %s3
  $region1: #{semantic_attention.3} parent=0
    #allocation2 [shape = 'u8[512]{0}', space=smem, size = 0x200, scoped, tag = 'input window, operand 0, single buffered']
    #allocation3 [shape = 's32[1]{0}', space=sflag, size = 0x4, scoped, tag = 'scoped memory for semantic_attention.3']
    %7 = vsyncpa [#allocation3], 0
    // Predicated region
    $region2: #{semantic_attention.3} parent=1 // pred_check
      _
    $region3: #{semantic_attention.3} parent=1 // pred_check_branch
      %9 = sbr.rel (0) target = $region5
    $region4: #{semantic_attention.3} parent=1 // pred_region
      %11 = vsyncadd [#allocation3], 0
      %s13 = sshll.u32 %s0, 4
      %s14 = int_to_ptr.vmem [resolvable:$true] %s13
      %16 = dma.vmem_to_smem %s14, 16, [#allocation2], [#allocation3]
    $region5: #{semantic_attention.3} parent=1 // pred_fallthru
      _
    // Predicated region
    $region6: #{semantic_attention.3} parent=1 // pred_check
      _
    $region7: #{semantic_attention.3} parent=1 // pred_check_branch
      %18 = sbr.rel (0) target = $region9
    $region8: #{semantic_attention.3} parent=1 // pred_region
      _
    $region9: #{semantic_attention.3} parent=1 // pred_fallthru
      _
    // Predicated region
    $region10: #{semantic_attention.3} parent=1 // pred_check
      _
    $region11: #{semantic_attention.3} parent=1 // pred_check_branch
      %20 = sbr.rel (0) target = $region13
    $region12: #{semantic_attention.3} parent=1 // pred_region
      %22 = dma.done [#allocation3], 16
    $region13: #{semantic_attention.3} parent=1 // pred_fallthru
      _
    %23 = sfence
    %s24 = sld [smem:[#allocation2]]
    %v25 = vld [vmem:[%s1] ss:$4 sm:$0xff]
    %s26 = scalar_lea.vmem %s1, 32
    %v27 = vld [vmem:[%s26] ss:$4 sm:$0xff]
    %s28 = scalar_lea.vmem %s1, 64
    %v29 = vld [vmem:[%s28] ss:$4 sm:$0xff]
    %s30 = scalar_lea.vmem %s1, 96
    %v31 = vld [vmem:[%s30] ss:$4 sm:$0xff]
    %s32 = scalar_lea.vmem %s1, 128
    %v33 = vld [vmem:[%s32] ss:$4 sm:$0xff]
    %s34 = scalar_lea.vmem %s1, 160
    %v35 = vld [vmem:[%s34] ss:$4 sm:$0xff]
    %s36 = scalar_lea.vmem %s1, 192
    %v37 = vld [vmem:[%s36] ss:$4 sm:$0xff]
    %s38 = scalar_lea.vmem %s1, 224
    %v39 = vld [vmem:[%s38] ss:$4 sm:$0xff]
    %s40 = scalar_lea.vmem %s1, 256
    %v41 = vld [vmem:[%s40] ss:$4 sm:$0xff]
    %s42 = scalar_lea.vmem %s1, 288
    %v43 = vld [vmem:[%s42] ss:$4 sm:$0xff]
    %s44 = scalar_lea.vmem %s1, 320
    %v45 = vld [vmem:[%s44] ss:$4 sm:$0xff]
    %s46 = scalar_lea.vmem %s1, 352
    %v47 = vld [vmem:[%s46] ss:$4 sm:$0xff]
    %s48 = scalar_lea.vmem %s1, 384
    %v49 = vld [vmem:[%s48] ss:$4 sm:$0xff]
    %s50 = scalar_lea.vmem %s1, 416
    %v51 = vld [vmem:[%s50] ss:$4 sm:$0xff]
    %s52 = scalar_lea.vmem %s1, 448
    %v53 = vld [vmem:[%s52] ss:$4 sm:$0xff]
    %s54 = scalar_lea.vmem %s1, 480
    %v55 = vld [vmem:[%s54] ss:$4 sm:$0xff]
    %s56 = scalar_lea.vmem %s1, 512
    %v57 = vld [vmem:[%s56] ss:$4 sm:$0xff]
    %s58 = scalar_lea.vmem %s1, 544
    %v59 = vld [vmem:[%s58] ss:$4 sm:$0xff]
    %s60 = scalar_lea.vmem %s1, 576
    %v61 = vld [vmem:[%s60] ss:$4 sm:$0xff]
    %s62 = scalar_lea.vmem %s1, 608
    %v63 = vld [vmem:[%s62] ss:$4 sm:$0xff]
    %s64 = scalar_lea.vmem %s1, 640
    %v65 = vld [vmem:[%s64] ss:$4 sm:$0xff]
    %s66 = scalar_lea.vmem %s1, 672
    %v67 = vld [vmem:[%s66] ss:$4 sm:$0xff]
    %s68 = scalar_lea.vmem %s1, 704
    %v69 = vld [vmem:[%s68] ss:$4 sm:$0xff]
    %s70 = scalar_lea.vmem %s1, 736
    %v71 = vld [vmem:[%s70] ss:$4 sm:$0xff]
    %s72 = scalar_lea.vmem %s1, 768
    %v73 = vld [vmem:[%s72] ss:$4 sm:$0xff]
    %s74 = scalar_lea.vmem %s1, 800
    %v75 = vld [vmem:[%s74] ss:$4 sm:$0xff]
    %s76 = scalar_lea.vmem %s1, 832
    %v77 = vld [vmem:[%s76] ss:$4 sm:$0xff]
    %s78 = scalar_lea.vmem %s1, 864
    %v79 = vld [vmem:[%s78] ss:$4 sm:$0xff]
    %s80 = scalar_lea.vmem %s1, 896
    %v81 = vld [vmem:[%s80] ss:$4 sm:$0xff]
    %s82 = scalar_lea.vmem %s1, 928
    %v83 = vld [vmem:[%s82] ss:$4 sm:$0xff]
    %s84 = scalar_lea.vmem %s1, 960
    %v85 = vld [vmem:[%s84] ss:$4 sm:$0xff]
    %s86 = scalar_lea.vmem %s1, 992
    %v87 = vld [vmem:[%s86] ss:$4 sm:$0xff]
    %s88 = scalar_lea.vmem %s1, 1024
    %v89 = vld [vmem:[%s88] ss:$4 sm:$0xff]
    %s90 = scalar_lea.vmem %s1, 1056
    %v91 = vld [vmem:[%s90] ss:$4 sm:$0xff]
    %s92 = scalar_lea.vmem %s1, 1088
    %v93 = vld [vmem:[%s92] ss:$4 sm:$0xff]
    %s94 = scalar_lea.vmem %s1, 1120
    %v95 = vld [vmem:[%s94] ss:$4 sm:$0xff]
    %s96 = scalar_lea.vmem %s1, 1152
    %v97 = vld [vmem:[%s96] ss:$4 sm:$0xff]
    %s98 = scalar_lea.vmem %s1, 1184
    %v99 = vld [vmem:[%s98] ss:$4 sm:$0xff]
    %s100 = scalar_lea.vmem %s1, 1216
    %v101 = vld [vmem:[%s100] ss:$4 sm:$0xff]
    %s102 = scalar_lea.vmem %s1, 1248
    %v103 = vld [vmem:[%s102] ss:$4 sm:$0xff]
    %s104 = scalar_lea.vmem %s1, 1280
    %v105 = vld [vmem:[%s104] ss:$4 sm:$0xff]
    %s106 = scalar_lea.vmem %s1, 1312
    %v107 = vld [vmem:[%s106] ss:$4 sm:$0xff]
    %s108 = scalar_lea.vmem %s1, 1344
    %v109 = vld [vmem:[%s108] ss:$4 sm:$0xff]
    %s110 = scalar_lea.vmem %s1, 1376
    %v111 = vld [vmem:[%s110] ss:$4 sm:$0xff]
    %s112 = scalar_lea.vmem %s1, 1408
    %v113 = vld [vmem:[%s112] ss:$4 sm:$0xff]
    %s114 = scalar_lea.vmem %s1, 1440
    %v115 = vld [vmem:[%s114] ss:$4 sm:$0xff]
    %s116 = scalar_lea.vmem %s1, 1472
    %v117 = vld [vmem:[%s116] ss:$4 sm:$0xff]
    %s118 = scalar_lea.vmem %s1, 1504
    %v119 = vld [vmem:[%s118] ss:$4 sm:$0xff]
    %s120 = scalar_lea.vmem %s1, 1536
    %v121 = vld [vmem:[%s120] ss:$4 sm:$0xff]
    %s122 = scalar_lea.vmem %s1, 1568
    %v123 = vld [vmem:[%s122] ss:$4 sm:$0xff]
    %s124 = scalar_lea.vmem %s1, 1600
    %v125 = vld [vmem:[%s124] ss:$4 sm:$0xff]
    %s126 = scalar_lea.vmem %s1, 1632
    %v127 = vld [vmem:[%s126] ss:$4 sm:$0xff]
    %s128 = scalar_lea.vmem %s1, 1664
    %v129 = vld [vmem:[%s128] ss:$4 sm:$0xff]
    %s130 = scalar_lea.vmem %s1, 1696
    %v131 = vld [vmem:[%s130] ss:$4 sm:$0xff]
    %s132 = scalar_lea.vmem %s1, 1728
    %v133 = vld [vmem:[%s132] ss:$4 sm:$0xff]
    %s134 = scalar_lea.vmem %s1, 1760
    %v135 = vld [vmem:[%s134] ss:$4 sm:$0xff]
    %s136 = scalar_lea.vmem %s1, 1792
    %v137 = vld [vmem:[%s136] ss:$4 sm:$0xff]
    %s138 = scalar_lea.vmem %s1, 1824
    %v139 = vld [vmem:[%s138] ss:$4 sm:$0xff]
    %s140 = scalar_lea.vmem %s1, 1856
    %v141 = vld [vmem:[%s140] ss:$4 sm:$0xff]
    %s142 = scalar_lea.vmem %s1, 1888
    %v143 = vld [vmem:[%s142] ss:$4 sm:$0xff]
    %s144 = scalar_lea.vmem %s1, 1920
    %v145 = vld [vmem:[%s144] ss:$4 sm:$0xff]
    %s146 = scalar_lea.vmem %s1, 1952
    %v147 = vld [vmem:[%s146] ss:$4 sm:$0xff]
    %s148 = scalar_lea.vmem %s1, 1984
    %v149 = vld [vmem:[%s148] ss:$4 sm:$0xff]
    %s150 = scalar_lea.vmem %s1, 2016
    %v151 = vld [vmem:[%s150] ss:$4 sm:$0xff]
    %v152 = vstv %s24
    %v153 = vmul.f32 %v152, %v25
    %v154 = vmul.f32 %v152, %v27
    %v155 = vmul.f32 %v152, %v29
    %v156 = vmul.f32 %v152, %v31
    %v157 = vmul.f32 %v152, %v33
    %v158 = vmul.f32 %v152, %v35
    %v159 = vmul.f32 %v152, %v37
    %v160 = vmul.f32 %v152, %v39
    %v161 = vmul.f32 %v152, %v41
    %v162 = vmul.f32 %v152, %v43
    %v163 = vmul.f32 %v152, %v45
    %v164 = vmul.f32 %v152, %v47
    %v165 = vmul.f32 %v152, %v49
    %v166 = vmul.f32 %v152, %v51
    %v167 = vmul.f32 %v152, %v53
    %v168 = vmul.f32 %v152, %v55
    %v169 = vmul.f32 %v152, %v57
    %v170 = vmul.f32 %v152, %v59
    %v171 = vmul.f32 %v152, %v61
    %v172 = vmul.f32 %v152, %v63
    %v173 = vmul.f32 %v152, %v65
    %v174 = vmul.f32 %v152, %v67
    %v175 = vmul.f32 %v152, %v69
    %v176 = vmul.f32 %v152, %v71
    %v177 = vmul.f32 %v152, %v73
    %v178 = vmul.f32 %v152, %v75
    %v179 = vmul.f32 %v152, %v77
    %v180 = vmul.f32 %v152, %v79
    %v181 = vmul.f32 %v152, %v81
    %v182 = vmul.f32 %v152, %v83
    %v183 = vmul.f32 %v152, %v85
    %v184 = vmul.f32 %v152, %v87
    %v185 = vmul.f32 %v152, %v89
    %v186 = vmul.f32 %v152, %v91
    %v187 = vmul.f32 %v152, %v93
    %v188 = vmul.f32 %v152, %v95
    %v189 = vmul.f32 %v152, %v97
    %v190 = vmul.f32 %v152, %v99
    %v191 = vmul.f32 %v152, %v101
    %v192 = vmul.f32 %v152, %v103
    %v193 = vmul.f32 %v152, %v105
    %v194 = vmul.f32 %v152, %v107
    %v195 = vmul.f32 %v152, %v109
    %v196 = vmul.f32 %v152, %v111
    %v197 = vmul.f32 %v152, %v113
    %v198 = vmul.f32 %v152, %v115
    %v199 = vmul.f32 %v152, %v117
    %v200 = vmul.f32 %v152, %v119
    %v201 = vmul.f32 %v152, %v121
    %v202 = vmul.f32 %v152, %v123
    %v203 = vmul.f32 %v152, %v125
    %v204 = vmul.f32 %v152, %v127
    %v205 = vmul.f32 %v152, %v129
    %v206 = vmul.f32 %v152, %v131
    %v207 = vmul.f32 %v152, %v133
    %v208 = vmul.f32 %v152, %v135
    %v209 = vmul.f32 %v152, %v137
    %v210 = vmul.f32 %v152, %v139
    %v211 = vmul.f32 %v152, %v141
    %v212 = vmul.f32 %v152, %v143
    %v213 = vmul.f32 %v152, %v145
    %v214 = vmul.f32 %v152, %v147
    %v215 = vmul.f32 %v152, %v149
    %v216 = vmul.f32 %v152, %v151
    %s217 = sld [smem:[#allocation2 + $0x1]]
    %s218 = scalar_lea.vmem %s1, 1
    %v219 = vld [vmem:[%s218] ss:$4 sm:$0xff]
    %s220 = scalar_lea.vmem %s1, 33
    %v221 = vld [vmem:[%s220] ss:$4 sm:$0xff]
    %s222 = scalar_lea.vmem %s1, 65
    %v223 = vld [vmem:[%s222] ss:$4 sm:$0xff]
    %s224 = scalar_lea.vmem %s1, 97
    %v225 = vld [vmem:[%s224] ss:$4 sm:$0xff]
    %s226 = scalar_lea.vmem %s1, 129
    %v227 = vld [vmem:[%s226] ss:$4 sm:$0xff]
    %s228 = scalar_lea.vmem %s1, 161
    %v229 = vld [vmem:[%s228] ss:$4 sm:$0xff]
    %s230 = scalar_lea.vmem %s1, 193
    %v231 = vld [vmem:[%s230] ss:$4 sm:$0xff]
    %s232 = scalar_lea.vmem %s1, 225
    %v233 = vld [vmem:[%s232] ss:$4 sm:$0xff]
    %s234 = scalar_lea.vmem %s1, 257
    %v235 = vld [vmem:[%s234] ss:$4 sm:$0xff]
    %s236 = scalar_lea.vmem %s1, 289
    %v237 = vld [vmem:[%s236] ss:$4 sm:$0xff]
    %s238 = scalar_lea.vmem %s1, 321
    %v239 = vld [vmem:[%s238] ss:$4 sm:$0xff]
    %s240 = scalar_lea.vmem %s1, 353
    %v241 = vld [vmem:[%s240] ss:$4 sm:$0xff]
    %s242 = scalar_lea.vmem %s1, 385
    %v243 = vld [vmem:[%s242] ss:$4 sm:$0xff]
    %s244 = scalar_lea.vmem %s1, 417
    %v245 = vld [vmem:[%s244] ss:$4 sm:$0xff]
    %s246 = scalar_lea.vmem %s1, 449
    %v247 = vld [vmem:[%s246] ss:$4 sm:$0xff]
    %s248 = scalar_lea.vmem %s1, 481
    %v249 = vld [vmem:[%s248] ss:$4 sm:$0xff]
    %s250 = scalar_lea.vmem %s1, 513
    %v251 = vld [vmem:[%s250] ss:$4 sm:$0xff]
    %s252 = scalar_lea.vmem %s1, 545
    %v253 = vld [vmem:[%s252] ss:$4 sm:$0xff]
    %s254 = scalar_lea.vmem %s1, 577
    %v255 = vld [vmem:[%s254] ss:$4 sm:$0xff]
    %s256 = scalar_lea.vmem %s1, 609
    %v257 = vld [vmem:[%s256] ss:$4 sm:$0xff]
    %s258 = scalar_lea.vmem %s1, 641
    %v259 = vld [vmem:[%s258] ss:$4 sm:$0xff]
    %s260 = scalar_lea.vmem %s1, 673
    %v261 = vld [vmem:[%s260] ss:$4 sm:$0xff]
    %s262 = scalar_lea.vmem %s1, 705
    %v263 = vld [vmem:[%s262] ss:$4 sm:$0xff]
    %s264 = scalar_lea.vmem %s1, 737
    %v265 = vld [vmem:[%s264] ss:$4 sm:$0xff]
    %s266 = scalar_lea.vmem %s1, 769
    %v267 = vld [vmem:[%s266] ss:$4 sm:$0xff]
    %s268 = scalar_lea.vmem %s1, 801
    %v269 = vld [vmem:[%s268] ss:$4 sm:$0xff]
    %s270 = scalar_lea.vmem %s1, 833
    %v271 = vld [vmem:[%s270] ss:$4 sm:$0xff]
    %s272 = scalar_lea.vmem %s1, 865
    %v273 = vld [vmem:[%s272] ss:$4 sm:$0xff]
    %s274 = scalar_lea.vmem %s1, 897
    %v275 = vld [vmem:[%s274] ss:$4 sm:$0xff]
    %s276 = scalar_lea.vmem %s1, 929
    %v277 = vld [vmem:[%s276] ss:$4 sm:$0xff]
    %s278 = scalar_lea.vmem %s1, 961
    %v279 = vld [vmem:[%s278] ss:$4 sm:$0xff]
    %s280 = scalar_lea.vmem %s1, 993
    %v281 = vld [vmem:[%s280] ss:$4 sm:$0xff]
    %s282 = scalar_lea.vmem %s1, 1025
    %v283 = vld [vmem:[%s282] ss:$4 sm:$0xff]
    %s284 = scalar_lea.vmem %s1, 1057
    %v285 = vld [vmem:[%s284] ss:$4 sm:$0xff]
    %s286 = scalar_lea.vmem %s1, 1089
    %v287 = vld [vmem:[%s286] ss:$4 sm:$0xff]
    %s288 = scalar_lea.vmem %s1, 1121
    %v289 = vld [vmem:[%s288] ss:$4 sm:$0xff]
    %s290 = scalar_lea.vmem %s1, 1153
    %v291 = vld [vmem:[%s290] ss:$4 sm:$0xff]
    %s292 = scalar_lea.vmem %s1, 1185
    %v293 = vld [vmem:[%s292] ss:$4 sm:$0xff]
    %s294 = scalar_lea.vmem %s1, 1217
    %v295 = vld [vmem:[%s294] ss:$4 sm:$0xff]
    %s296 = scalar_lea.vmem %s1, 1249
    %v297 = vld [vmem:[%s296] ss:$4 sm:$0xff]
    %s298 = scalar_lea.vmem %s1, 1281
    %v299 = vld [vmem:[%s298] ss:$4 sm:$0xff]
    %s300 = scalar_lea.vmem %s1, 1313
    %v301 = vld [vmem:[%s300] ss:$4 sm:$0xff]
    %s302 = scalar_lea.vmem %s1, 1345
    %v303 = vld [vmem:[%s302] ss:$4 sm:$0xff]
    %s304 = scalar_lea.vmem %s1, 1377
    %v305 = vld [vmem:[%s304] ss:$4 sm:$0xff]
    %s306 = scalar_lea.vmem %s1, 1409
    %v307 = vld [vmem:[%s306] ss:$4 sm:$0xff]
    %s308 = scalar_lea.vmem %s1, 1441
    %v309 = vld [vmem:[%s308] ss:$4 sm:$0xff]
    %s310 = scalar_lea.vmem %s1, 1473
    %v311 = vld [vmem:[%s310] ss:$4 sm:$0xff]
    %s312 = scalar_lea.vmem %s1, 1505
    %v313 = vld [vmem:[%s312] ss:$4 sm:$0xff]
    %s314 = scalar_lea.vmem %s1, 1537
    %v315 = vld [vmem:[%s314] ss:$4 sm:$0xff]
    %s316 = scalar_lea.vmem %s1, 1569
    %v317 = vld [vmem:[%s316] ss:$4 sm:$0xff]
    %s318 = scalar_lea.vmem %s1, 1601
    %v319 = vld [vmem:[%s318] ss:$4 sm:$0xff]
    %s320 = scalar_lea.vmem %s1, 1633
    %v321 = vld [vmem:[%s320] ss:$4 sm:$0xff]
    %s322 = scalar_lea.vmem %s1, 1665
    %v323 = vld [vmem:[%s322] ss:$4 sm:$0xff]
    %s324 = scalar_lea.vmem %s1, 1697
    %v325 = vld [vmem:[%s324] ss:$4 sm:$0xff]
    %s326 = scalar_lea.vmem %s1, 1729
    %v327 = vld [vmem:[%s326] ss:$4 sm:$0xff]
    %s328 = scalar_lea.vmem %s1, 1761
    %v329 = vld [vmem:[%s328] ss:$4 sm:$0xff]
    %s330 = scalar_lea.vmem %s1, 1793
    %v331 = vld [vmem:[%s330] ss:$4 sm:$0xff]
    %s332 = scalar_lea.vmem %s1, 1825
    %v333 = vld [vmem:[%s332] ss:$4 sm:$0xff]
    %s334 = scalar_lea.vmem %s1, 1857
    %v335 = vld [vmem:[%s334] ss:$4 sm:$0xff]
    %s336 = scalar_lea.vmem %s1, 1889
    %v337 = vld [vmem:[%s336] ss:$4 sm:$0xff]
    %s338 = scalar_lea.vmem %s1, 1921
    %v339 = vld [vmem:[%s338] ss:$4 sm:$0xff]
    %s340 = scalar_lea.vmem %s1, 1953
    %v341 = vld [vmem:[%s340] ss:$4 sm:$0xff]
    %s342 = scalar_lea.vmem %s1, 1985
    %v343 = vld [vmem:[%s342] ss:$4 sm:$0xff]
    %s344 = scalar_lea.vmem %s1, 2017
    %v345 = vld [vmem:[%s344] ss:$4 sm:$0xff]
    %v346 = vstv %s217
    %v347 = vmul.f32 %v346, %v219
    %v348 = vmul.f32 %v346, %v221
    %v349 = vmul.f32 %v346, %v223
    %v350 = vmul.f32 %v346, %v225
    %v351 = vmul.f32 %v346, %v227
    %v352 = vmul.f32 %v346, %v229
    %v353 = vmul.f32 %v346, %v231
    %v354 = vmul.f32 %v346, %v233
    %v355 = vmul.f32 %v346, %v235
    %v356 = vmul.f32 %v346, %v237
    %v357 = vmul.f32 %v346, %v239
    %v358 = vmul.f32 %v346, %v241
    %v359 = vmul.f32 %v346, %v243
    %v360 = vmul.f32 %v346, %v245
    %v361 = vmul.f32 %v346, %v247
    %v362 = vmul.f32 %v346, %v249
    %v363 = vmul.f32 %v346, %v251
    %v364 = vmul.f32 %v346, %v253
    %v365 = vmul.f32 %v346, %v255
    %v366 = vmul.f32 %v346, %v257
    %v367 = vmul.f32 %v346, %v259
    %v368 = vmul.f32 %v346, %v261
    %v369 = vmul.f32 %v346, %v263
    %v370 = vmul.f32 %v346, %v265
    %v371 = vmul.f32 %v346, %v267
    %v372 = vmul.f32 %v346, %v269
    %v373 = vmul.f32 %v346, %v271
    %v374 = vmul.f32 %v346, %v273
    %v375 = vmul.f32 %v346, %v275
    %v376 = vmul.f32 %v346, %v277
    %v377 = vmul.f32 %v346, %v279
    %v378 = vmul.f32 %v346, %v281
    %v379 = vmul.f32 %v346, %v283
    %v380 = vmul.f32 %v346, %v285
    %v381 = vmul.f32 %v346, %v287
    %v382 = vmul.f32 %v346, %v289
    %v383 = vmul.f32 %v346, %v291
    %v384 = vmul.f32 %v346, %v293
    %v385 = vmul.f32 %v346, %v295
    %v386 = vmul.f32 %v346, %v297
    %v387 = vmul.f32 %v346, %v299
    %v388 = vmul.f32 %v346, %v301
    %v389 = vmul.f32 %v346, %v303
    %v390 = vmul.f32 %v346, %v305
    %v391 = vmul.f32 %v346, %v307
    %v392 = vmul.f32 %v346, %v309
    %v393 = vmul.f32 %v346, %v311
    %v394 = vmul.f32 %v346, %v313
    %v395 = vmul.f32 %v346, %v315
    %v396 = vmul.f32 %v346, %v317
    %v397 = vmul.f32 %v346, %v319
    %v398 = vmul.f32 %v346, %v321
    %v399 = vmul.f32 %v346, %v323
    %v400 = vmul.f32 %v346, %v325
    %v401 = vmul.f32 %v346, %v327
    %v402 = vmul.f32 %v346, %v329
    %v403 = vmul.f32 %v346, %v331
    %v404 = vmul.f32 %v346, %v333
    %v405 = vmul.f32 %v346, %v335
    %v406 = vmul.f32 %v346, %v337
    %v407 = vmul.f32 %v346, %v339
    %v408 = vmul.f32 %v346, %v341
    %v409 = vmul.f32 %v346, %v343
    %v410 = vmul.f32 %v346, %v345
    %v411 = vadd.f32 %v153, %v347
    %v412 = vadd.f32 %v154, %v348
    %v413 = vadd.f32 %v155, %v349
    %v414 = vadd.f32 %v156, %v350
    %v415 = vadd.f32 %v157, %v351
    %v416 = vadd.f32 %v158, %v352
    %v417 = vadd.f32 %v159, %v353
    %v418 = vadd.f32 %v160, %v354
    %v419 = vadd.f32 %v161, %v355
    %v420 = vadd.f32 %v162, %v356
    %v421 = vadd.f32 %v163, %v357
    %v422 = vadd.f32 %v164, %v358
    %v423 = vadd.f32 %v165, %v359
    %v424 = vadd.f32 %v166, %v360
    %v425 = vadd.f32 %v167, %v361
    %v426 = vadd.f32 %v168, %v362
    %v427 = vadd.f32 %v169, %v363
    %v428 = vadd.f32 %v170, %v364
    %v429 = vadd.f32 %v171, %v365
    %v430 = vadd.f32 %v172, %v366
    %v431 = vadd.f32 %v173, %v367
    %v432 = vadd.f32 %v174, %v368
    %v433 = vadd.f32 %v175, %v369
    %v434 = vadd.f32 %v176, %v370
    %v435 = vadd.f32 %v177, %v371
    %v436 = vadd.f32 %v178, %v372
    %v437 = vadd.f32 %v179, %v373
    %v438 = vadd.f32 %v180, %v374
    %v439 = vadd.f32 %v181, %v375
    %v440 = vadd.f32 %v182, %v376
    %v441 = vadd.f32 %v183, %v377
    %v442 = vadd.f32 %v184, %v378
    %v443 = vadd.f32 %v185, %v379
    %v444 = vadd.f32 %v186, %v380
    %v445 = vadd.f32 %v187, %v381
    %v446 = vadd.f32 %v188, %v382
    %v447 = vadd.f32 %v189, %v383
    %v448 = vadd.f32 %v190, %v384
    %v449 = vadd.f32 %v191, %v385
    %v450 = vadd.f32 %v192, %v386
    %v451 = vadd.f32 %v193, %v387
    %v452 = vadd.f32 %v194, %v388
    %v453 = vadd.f32 %v195, %v389
    %v454 = vadd.f32 %v196, %v390
    %v455 = vadd.f32 %v197, %v391
    %v456 = vadd.f32 %v198, %v392
    %v457 = vadd.f32 %v199, %v393
    %v458 = vadd.f32 %v200, %v394
    %v459 = vadd.f32 %v201, %v395
    %v460 = vadd.f32 %v202, %v396
    %v461 = vadd.f32 %v203, %v397
    %v462 = vadd.f32 %v204, %v398
    %v463 = vadd.f32 %v205, %v399
    %v464 = vadd.f32 %v206, %v400
    %v465 = vadd.f32 %v207, %v401
    %v466 = vadd.f32 %v208, %v402
    %v467 = vadd.f32 %v209, %v403
    %v468 = vadd.f32 %v210, %v404
    %v469 = vadd.f32 %v211, %v405
    %v470 = vadd.f32 %v212, %v406
    %v471 = vadd.f32 %v213, %v407
    %v472 = vadd.f32 %v214, %v408
    %v473 = vadd.f32 %v215, %v409
    %v474 = vadd.f32 %v216, %v410
    %s475 = sld [smem:[#allocation2 + $0x2]]
    %s476 = scalar_lea.vmem %s1, 2
    %v477 = vld [vmem:[%s476] ss:$4 sm:$0xff]
    %s478 = scalar_lea.vmem %s1, 34
    %v479 = vld [vmem:[%s478] ss:$4 sm:$0xff]
    %s480 = scalar_lea.vmem %s1, 66
    %v481 = vld [vmem:[%s480] ss:$4 sm:$0xff]
    %s482 = scalar_lea.vmem %s1, 98
    %v483 = vld [vmem:[%s482] ss:$4 sm:$0xff]
    %s484 = scalar_lea.vmem %s1, 130
    %v485 = vld [vmem:[%s484] ss:$4 sm:$0xff]
    %s486 = scalar_lea.vmem %s1, 162
    %v487 = vld [vmem:[%s486] ss:$4 sm:$0xff]
    %s488 = scalar_lea.vmem %s1, 194
    %v489 = vld [vmem:[%s488] ss:$4 sm:$0xff]
    %s490 = scalar_lea.vmem %s1, 226
    %v491 = vld [vmem:[%s490] ss:$4 sm:$0xff]
    %s492 = scalar_lea.vmem %s1, 258
    %v493 = vld [vmem:[%s492] ss:$4 sm:$0xff]
    %s494 = scalar_lea.vmem %s1, 290
    %v495 = vld [vmem:[%s494] ss:$4 sm:$0xff]
    %s496 = scalar_lea.vmem %s1, 322
    %v497 = vld [vmem:[%s496] ss:$4 sm:$0xff]
    %s498 = scalar_lea.vmem %s1, 354
    %v499 = vld [vmem:[%s498] ss:$4 sm:$0xff]
    %s500 = scalar_lea.vmem %s1, 386
    %v501 = vld [vmem:[%s500] ss:$4 sm:$0xff]
    %s502 = scalar_lea.vmem %s1, 418
    %v503 = vld [vmem:[%s502] ss:$4 sm:$0xff]
    %s504 = scalar_lea.vmem %s1, 450
    %v505 = vld [vmem:[%s504] ss:$4 sm:$0xff]
    %s506 = scalar_lea.vmem %s1, 482
    %v507 = vld [vmem:[%s506] ss:$4 sm:$0xff]
    %s508 = scalar_lea.vmem %s1, 514
    %v509 = vld [vmem:[%s508] ss:$4 sm:$0xff]
    %s510 = scalar_lea.vmem %s1, 546
    %v511 = vld [vmem:[%s510] ss:$4 sm:$0xff]
    %s512 = scalar_lea.vmem %s1, 578
    %v513 = vld [vmem:[%s512] ss:$4 sm:$0xff]
    %s514 = scalar_lea.vmem %s1, 610
    %v515 = vld [vmem:[%s514] ss:$4 sm:$0xff]
    %s516 = scalar_lea.vmem %s1, 642
    %v517 = vld [vmem:[%s516] ss:$4 sm:$0xff]
    %s518 = scalar_lea.vmem %s1, 674
    %v519 = vld [vmem:[%s518] ss:$4 sm:$0xff]
    %s520 = scalar_lea.vmem %s1, 706
    %v521 = vld [vmem:[%s520] ss:$4 sm:$0xff]
    %s522 = scalar_lea.vmem %s1, 738
    %v523 = vld [vmem:[%s522] ss:$4 sm:$0xff]
    %s524 = scalar_lea.vmem %s1, 770
    %v525 = vld [vmem:[%s524] ss:$4 sm:$0xff]
    %s526 = scalar_lea.vmem %s1, 802
    %v527 = vld [vmem:[%s526] ss:$4 sm:$0xff]
    %s528 = scalar_lea.vmem %s1, 834
    %v529 = vld [vmem:[%s528] ss:$4 sm:$0xff]
    %s530 = scalar_lea.vmem %s1, 866
    %v531 = vld [vmem:[%s530] ss:$4 sm:$0xff]
    %s532 = scalar_lea.vmem %s1, 898
    %v533 = vld [vmem:[%s532] ss:$4 sm:$0xff]
    %s534 = scalar_lea.vmem %s1, 930
    %v535 = vld [vmem:[%s534] ss:$4 sm:$0xff]
    %s536 = scalar_lea.vmem %s1, 962
    %v537 = vld [vmem:[%s536] ss:$4 sm:$0xff]
    %s538 = scalar_lea.vmem %s1, 994
    %v539 = vld [vmem:[%s538] ss:$4 sm:$0xff]
    %s540 = scalar_lea.vmem %s1, 1026
    %v541 = vld [vmem:[%s540] ss:$4 sm:$0xff]
    %s542 = scalar_lea.vmem %s1, 1058
    %v543 = vld [vmem:[%s542] ss:$4 sm:$0xff]
    %s544 = scalar_lea.vmem %s1, 1090
    %v545 = vld [vmem:[%s544] ss:$4 sm:$0xff]
    %s546 = scalar_lea.vmem %s1, 1122
    %v547 = vld [vmem:[%s546] ss:$4 sm:$0xff]
    %s548 = scalar_lea.vmem %s1, 1154
    %v549 = vld [vmem:[%s548] ss:$4 sm:$0xff]
    %s550 = scalar_lea.vmem %s1, 1186
    %v551 = vld [vmem:[%s550] ss:$4 sm:$0xff]
    %s552 = scalar_lea.vmem %s1, 1218
    %v553 = vld [vmem:[%s552] ss:$4 sm:$0xff]
    %s554 = scalar_lea.vmem %s1, 1250
    %v555 = vld [vmem:[%s554] ss:$4 sm:$0xff]
    %s556 = scalar_lea.vmem %s1, 1282
    %v557 = vld [vmem:[%s556] ss:$4 sm:$0xff]
    %s558 = scalar_lea.vmem %s1, 1314
    %v559 = vld [vmem:[%s558] ss:$4 sm:$0xff]
    %s560 = scalar_lea.vmem %s1, 1346
    %v561 = vld [vmem:[%s560] ss:$4 sm:$0xff]
    %s562 = scalar_lea.vmem %s1, 1378
    %v563 = vld [vmem:[%s562] ss:$4 sm:$0xff]
    %s564 = scalar_lea.vmem %s1, 1410
    %v565 = vld [vmem:[%s564] ss:$4 sm:$0xff]
    %s566 = scalar_lea.vmem %s1, 1442
    %v567 = vld [vmem:[%s566] ss:$4 sm:$0xff]
    %s568 = scalar_lea.vmem %s1, 1474
    %v569 = vld [vmem:[%s568] ss:$4 sm:$0xff]
    %s570 = scalar_lea.vmem %s1, 1506
    %v571 = vld [vmem:[%s570] ss:$4 sm:$0xff]
    %s572 = scalar_lea.vmem %s1, 1538
    %v573 = vld [vmem:[%s572] ss:$4 sm:$0xff]
    %s574 = scalar_lea.vmem %s1, 1570
    %v575 = vld [vmem:[%s574] ss:$4 sm:$0xff]
    %s576 = scalar_lea.vmem %s1, 1602
    %v577 = vld [vmem:[%s576] ss:$4 sm:$0xff]
    %s578 = scalar_lea.vmem %s1, 1634
    %v579 = vld [vmem:[%s578] ss:$4 sm:$0xff]
    %s580 = scalar_lea.vmem %s1, 1666
    %v581 = vld [vmem:[%s580] ss:$4 sm:$0xff]
    %s582 = scalar_lea.vmem %s1, 1698
    %v583 = vld [vmem:[%s582] ss:$4 sm:$0xff]
    %s584 = scalar_lea.vmem %s1, 1730
    %v585 = vld [vmem:[%s584] ss:$4 sm:$0xff]
    %s586 = scalar_lea.vmem %s1, 1762
    %v587 = vld [vmem:[%s586] ss:$4 sm:$0xff]
    %s588 = scalar_lea.vmem %s1, 1794
    %v589 = vld [vmem:[%s588] ss:$4 sm:$0xff]
    %s590 = scalar_lea.vmem %s1, 1826
    %v591 = vld [vmem:[%s590] ss:$4 sm:$0xff]
    %s592 = scalar_lea.vmem %s1, 1858
    %v593 = vld [vmem:[%s592] ss:$4 sm:$0xff]
    %s594 = scalar_lea.vmem %s1, 1890
    %v595 = vld [vmem:[%s594] ss:$4 sm:$0xff]
    %s596 = scalar_lea.vmem %s1, 1922
    %v597 = vld [vmem:[%s596] ss:$4 sm:$0xff]
    %s598 = scalar_lea.vmem %s1, 1954
    %v599 = vld [vmem:[%s598] ss:$4 sm:$0xff]
    %s600 = scalar_lea.vmem %s1, 1986
    %v601 = vld [vmem:[%s600] ss:$4 sm:$0xff]
    %s602 = scalar_lea.vmem %s1, 2018
    %v603 = vld [vmem:[%s602] ss:$4 sm:$0xff]
    %v604 = vstv %s475
    %v605 = vmul.f32 %v604, %v477
    %v606 = vmul.f32 %v604, %v479
    %v607 = vmul.f32 %v604, %v481
    %v608 = vmul.f32 %v604, %v483
    %v609 = vmul.f32 %v604, %v485
    %v610 = vmul.f32 %v604, %v487
    %v611 = vmul.f32 %v604, %v489
    %v612 = vmul.f32 %v604, %v491
    %v613 = vmul.f32 %v604, %v493
    %v614 = vmul.f32 %v604, %v495
    %v615 = vmul.f32 %v604, %v497
    %v616 = vmul.f32 %v604, %v499
    %v617 = vmul.f32 %v604, %v501
    %v618 = vmul.f32 %v604, %v503
    %v619 = vmul.f32 %v604, %v505
    %v620 = vmul.f32 %v604, %v507
    %v621 = vmul.f32 %v604, %v509
    %v622 = vmul.f32 %v604, %v511
    %v623 = vmul.f32 %v604, %v513
    %v624 = vmul.f32 %v604, %v515
    %v625 = vmul.f32 %v604, %v517
    %v626 = vmul.f32 %v604, %v519
    %v627 = vmul.f32 %v604, %v521
    %v628 = vmul.f32 %v604, %v523
    %v629 = vmul.f32 %v604, %v525
    %v630 = vmul.f32 %v604, %v527
    %v631 = vmul.f32 %v604, %v529
    %v632 = vmul.f32 %v604, %v531
    %v633 = vmul.f32 %v604, %v533
    %v634 = vmul.f32 %v604, %v535
    %v635 = vmul.f32 %v604, %v537
    %v636 = vmul.f32 %v604, %v539
    %v637 = vmul.f32 %v604, %v541
    %v638 = vmul.f32 %v604, %v543
    %v639 = vmul.f32 %v604, %v545
    %v640 = vmul.f32 %v604, %v547
    %v641 = vmul.f32 %v604, %v549
    %v642 = vmul.f32 %v604, %v551
    %v643 = vmul.f32 %v604, %v553
    %v644 = vmul.f32 %v604, %v555
    %v645 = vmul.f32 %v604, %v557
    %v646 = vmul.f32 %v604, %v559
    %v647 = vmul.f32 %v604, %v561
    %v648 = vmul.f32 %v604, %v563
    %v649 = vmul.f32 %v604, %v565
    %v650 = vmul.f32 %v604, %v567
    %v651 = vmul.f32 %v604, %v569
    %v652 = vmul.f32 %v604, %v571
    %v653 = vmul.f32 %v604, %v573
    %v654 = vmul.f32 %v604, %v575
    %v655 = vmul.f32 %v604, %v577
    %v656 = vmul.f32 %v604, %v579
    %v657 = vmul.f32 %v604, %v581
    %v658 = vmul.f32 %v604, %v583
    %v659 = vmul.f32 %v604, %v585
    %v660 = vmul.f32 %v604, %v587
    %v661 = vmul.f32 %v604, %v589
    %v662 = vmul.f32 %v604, %v591
    %v663 = vmul.f32 %v604, %v593
    %v664 = vmul.f32 %v604, %v595
    %v665 = vmul.f32 %v604, %v597
    %v666 = vmul.f32 %v604, %v599
    %v667 = vmul.f32 %v604, %v601
    %v668 = vmul.f32 %v604, %v603
    %v669 = vadd.f32 %v411, %v605
    %v670 = vadd.f32 %v412, %v606
    %v671 = vadd.f32 %v413, %v607
    %v672 = vadd.f32 %v414, %v608
    %v673 = vadd.f32 %v415, %v609
    %v674 = vadd.f32 %v416, %v610
    %v675 = vadd.f32 %v417, %v611
    %v676 = vadd.f32 %v418, %v612
    %v677 = vadd.f32 %v419, %v613
    %v678 = vadd.f32 %v420, %v614
    %v679 = vadd.f32 %v421, %v615
    %v680 = vadd.f32 %v422, %v616
    %v681 = vadd.f32 %v423, %v617
    %v682 = vadd.f32 %v424, %v618
    %v683 = vadd.f32 %v425, %v619
    %v684 = vadd.f32 %v426, %v620
    %v685 = vadd.f32 %v427, %v621
    %v686 = vadd.f32 %v428, %v622
    %v687 = vadd.f32 %v429, %v623
    %v688 = vadd.f32 %v430, %v624
    %v689 = vadd.f32 %v431, %v625
    %v690 = vadd.f32 %v432, %v626
    %v691 = vadd.f32 %v433, %v627
    %v692 = vadd.f32 %v434, %v628
    %v693 = vadd.f32 %v435, %v629
    %v694 = vadd.f32 %v436, %v630
    %v695 = vadd.f32 %v437, %v631
    %v696 = vadd.f32 %v438, %v632
    %v697 = vadd.f32 %v439, %v633
    %v698 = vadd.f32 %v440, %v634
    %v699 = vadd.f32 %v441, %v635
    %v700 = vadd.f32 %v442, %v636
    %v701 = vadd.f32 %v443, %v637
    %v702 = vadd.f32 %v444, %v638
    %v703 = vadd.f32 %v445, %v639
    %v704 = vadd.f32 %v446, %v640
    %v705 = vadd.f32 %v447, %v641
    %v706 = vadd.f32 %v448, %v642
    %v707 = vadd.f32 %v449, %v643
    %v708 = vadd.f32 %v450, %v644
    %v709 = vadd.f32 %v451, %v645
    %v710 = vadd.f32 %v452, %v646
    %v711 = vadd.f32 %v453, %v647
    %v712 = vadd.f32 %v454, %v648
    %v713 = vadd.f32 %v455, %v649
    %v714 = vadd.f32 %v456, %v650
    %v715 = vadd.f32 %v457, %v651
    %v716 = vadd.f32 %v458, %v652
    %v717 = vadd.f32 %v459, %v653
    %v718 = vadd.f32 %v460, %v654
    %v719 = vadd.f32 %v461, %v655
    %v720 = vadd.f32 %v462, %v656
    %v721 = vadd.f32 %v463, %v657
    %v722 = vadd.f32 %v464, %v658
    %v723 = vadd.f32 %v465, %v659
    %v724 = vadd.f32 %v466, %v660
    %v725 = vadd.f32 %v467, %v661
    %v726 = vadd.f32 %v468, %v662
    %v727 = vadd.f32 %v469, %v663
    %v728 = vadd.f32 %v470, %v664
    %v729 = vadd.f32 %v471, %v665
    %v730 = vadd.f32 %v472, %v666
    %v731 = vadd.f32 %v473, %v667
    %v732 = vadd.f32 %v474, %v668
    %s733 = sld [smem:[#allocation2 + $0x3]]
    %s734 = scalar_lea.vmem %s1, 3
    %v735 = vld [vmem:[%s734] ss:$4 sm:$0xff]
    %s736 = scalar_lea.vmem %s1, 35
    %v737 = vld [vmem:[%s736] ss:$4 sm:$0xff]
    %s738 = scalar_lea.vmem %s1, 67
    %v739 = vld [vmem:[%s738] ss:$4 sm:$0xff]
    %s740 = scalar_lea.vmem %s1, 99
    %v741 = vld [vmem:[%s740] ss:$4 sm:$0xff]
    %s742 = scalar_lea.vmem %s1, 131
    %v743 = vld [vmem:[%s742] ss:$4 sm:$0xff]
    %s744 = scalar_lea.vmem %s1, 163
    %v745 = vld [vmem:[%s744] ss:$4 sm:$0xff]
    %s746 = scalar_lea.vmem %s1, 195
    %v747 = vld [vmem:[%s746] ss:$4 sm:$0xff]
    %s748 = scalar_lea.vmem %s1, 227
    %v749 = vld [vmem:[%s748] ss:$4 sm:$0xff]
    %s750 = scalar_lea.vmem %s1, 259
    %v751 = vld [vmem:[%s750] ss:$4 sm:$0xff]
    %s752 = scalar_lea.vmem %s1, 291
    %v753 = vld [vmem:[%s752] ss:$4 sm:$0xff]
    %s754 = scalar_lea.vmem %s1, 323
    %v755 = vld [vmem:[%s754] ss:$4 sm:$0xff]
    %s756 = scalar_lea.vmem %s1, 355
    %v757 = vld [vmem:[%s756] ss:$4 sm:$0xff]
    %s758 = scalar_lea.vmem %s1, 387
    %v759 = vld [vmem:[%s758] ss:$4 sm:$0xff]
    %s760 = scalar_lea.vmem %s1, 419
    %v761 = vld [vmem:[%s760] ss:$4 sm:$0xff]
    %s762 = scalar_lea.vmem %s1, 451
    %v763 = vld [vmem:[%s762] ss:$4 sm:$0xff]
    %s764 = scalar_lea.vmem %s1, 483
    %v765 = vld [vmem:[%s764] ss:$4 sm:$0xff]
    %s766 = scalar_lea.vmem %s1, 515
    %v767 = vld [vmem:[%s766] ss:$4 sm:$0xff]
    %s768 = scalar_lea.vmem %s1, 547
    %v769 = vld [vmem:[%s768] ss:$4 sm:$0xff]
    %s770 = scalar_lea.vmem %s1, 579
    %v771 = vld [vmem:[%s770] ss:$4 sm:$0xff]
    %s772 = scalar_lea.vmem %s1, 611
    %v773 = vld [vmem:[%s772] ss:$4 sm:$0xff]
    %s774 = scalar_lea.vmem %s1, 643
    %v775 = vld [vmem:[%s774] ss:$4 sm:$0xff]
    %s776 = scalar_lea.vmem %s1, 675
    %v777 = vld [vmem:[%s776] ss:$4 sm:$0xff]
    %s778 = scalar_lea.vmem %s1, 707
    %v779 = vld [vmem:[%s778] ss:$4 sm:$0xff]
    %s780 = scalar_lea.vmem %s1, 739
    %v781 = vld [vmem:[%s780] ss:$4 sm:$0xff]
    %s782 = scalar_lea.vmem %s1, 771
    %v783 = vld [vmem:[%s782] ss:$4 sm:$0xff]
    %s784 = scalar_lea.vmem %s1, 803
    %v785 = vld [vmem:[%s784] ss:$4 sm:$0xff]
    %s786 = scalar_lea.vmem %s1, 835
    %v787 = vld [vmem:[%s786] ss:$4 sm:$0xff]
    %s788 = scalar_lea.vmem %s1, 867
    %v789 = vld [vmem:[%s788] ss:$4 sm:$0xff]
    %s790 = scalar_lea.vmem %s1, 899
    %v791 = vld [vmem:[%s790] ss:$4 sm:$0xff]
    %s792 = scalar_lea.vmem %s1, 931
    %v793 = vld [vmem:[%s792] ss:$4 sm:$0xff]
    %s794 = scalar_lea.vmem %s1, 963
    %v795 = vld [vmem:[%s794] ss:$4 sm:$0xff]
    %s796 = scalar_lea.vmem %s1, 995
    %v797 = vld [vmem:[%s796] ss:$4 sm:$0xff]
    %s798 = scalar_lea.vmem %s1, 1027
    %v799 = vld [vmem:[%s798] ss:$4 sm:$0xff]
    %s800 = scalar_lea.vmem %s1, 1059
    %v801 = vld [vmem:[%s800] ss:$4 sm:$0xff]
    %s802 = scalar_lea.vmem %s1, 1091
    %v803 = vld [vmem:[%s802] ss:$4 sm:$0xff]
    %s804 = scalar_lea.vmem %s1, 1123
    %v805 = vld [vmem:[%s804] ss:$4 sm:$0xff]
    %s806 = scalar_lea.vmem %s1, 1155
    %v807 = vld [vmem:[%s806] ss:$4 sm:$0xff]
    %s808 = scalar_lea.vmem %s1, 1187
    %v809 = vld [vmem:[%s808] ss:$4 sm:$0xff]
    %s810 = scalar_lea.vmem %s1, 1219
    %v811 = vld [vmem:[%s810] ss:$4 sm:$0xff]
    %s812 = scalar_lea.vmem %s1, 1251
    %v813 = vld [vmem:[%s812] ss:$4 sm:$0xff]
    %s814 = scalar_lea.vmem %s1, 1283
    %v815 = vld [vmem:[%s814] ss:$4 sm:$0xff]
    %s816 = scalar_lea.vmem %s1, 1315
    %v817 = vld [vmem:[%s816] ss:$4 sm:$0xff]
    %s818 = scalar_lea.vmem %s1, 1347
    %v819 = vld [vmem:[%s818] ss:$4 sm:$0xff]
    %s820 = scalar_lea.vmem %s1, 1379
    %v821 = vld [vmem:[%s820] ss:$4 sm:$0xff]
    %s822 = scalar_lea.vmem %s1, 1411
    %v823 = vld [vmem:[%s822] ss:$4 sm:$0xff]
    %s824 = scalar_lea.vmem %s1, 1443
    %v825 = vld [vmem:[%s824] ss:$4 sm:$0xff]
    %s826 = scalar_lea.vmem %s1, 1475
    %v827 = vld [vmem:[%s826] ss:$4 sm:$0xff]
    %s828 = scalar_lea.vmem %s1, 1507
    %v829 = vld [vmem:[%s828] ss:$4 sm:$0xff]
    %s830 = scalar_lea.vmem %s1, 1539
    %v831 = vld [vmem:[%s830] ss:$4 sm:$0xff]
    %s832 = scalar_lea.vmem %s1, 1571
    %v833 = vld [vmem:[%s832] ss:$4 sm:$0xff]
    %s834 = scalar_lea.vmem %s1, 1603
    %v835 = vld [vmem:[%s834] ss:$4 sm:$0xff]
    %s836 = scalar_lea.vmem %s1, 1635
    %v837 = vld [vmem:[%s836] ss:$4 sm:$0xff]
    %s838 = scalar_lea.vmem %s1, 1667
    %v839 = vld [vmem:[%s838] ss:$4 sm:$0xff]
    %s840 = scalar_lea.vmem %s1, 1699
    %v841 = vld [vmem:[%s840] ss:$4 sm:$0xff]
    %s842 = scalar_lea.vmem %s1, 1731
    %v843 = vld [vmem:[%s842] ss:$4 sm:$0xff]
    %s844 = scalar_lea.vmem %s1, 1763
    %v845 = vld [vmem:[%s844] ss:$4 sm:$0xff]
    %s846 = scalar_lea.vmem %s1, 1795
    %v847 = vld [vmem:[%s846] ss:$4 sm:$0xff]
    %s848 = scalar_lea.vmem %s1, 1827
    %v849 = vld [vmem:[%s848] ss:$4 sm:$0xff]
    %s850 = scalar_lea.vmem %s1, 1859
    %v851 = vld [vmem:[%s850] ss:$4 sm:$0xff]
    %s852 = scalar_lea.vmem %s1, 1891
    %v853 = vld [vmem:[%s852] ss:$4 sm:$0xff]
    %s854 = scalar_lea.vmem %s1, 1923
    %v855 = vld [vmem:[%s854] ss:$4 sm:$0xff]
    %s856 = scalar_lea.vmem %s1, 1955
    %v857 = vld [vmem:[%s856] ss:$4 sm:$0xff]
    %s858 = scalar_lea.vmem %s1, 1987
    %v859 = vld [vmem:[%s858] ss:$4 sm:$0xff]
    %s860 = scalar_lea.vmem %s1, 2019
    %v861 = vld [vmem:[%s860] ss:$4 sm:$0xff]
    %v862 = vstv %s733
    %v863 = vmul.f32 %v862, %v735
    %v864 = vmul.f32 %v862, %v737
    %v865 = vmul.f32 %v862, %v739
    %v866 = vmul.f32 %v862, %v741
    %v867 = vmul.f32 %v862, %v743
    %v868 = vmul.f32 %v862, %v745
    %v869 = vmul.f32 %v862, %v747
    %v870 = vmul.f32 %v862, %v749
    %v871 = vmul.f32 %v862, %v751
    %v872 = vmul.f32 %v862, %v753
    %v873 = vmul.f32 %v862, %v755
    %v874 = vmul.f32 %v862, %v757
    %v875 = vmul.f32 %v862, %v759
    %v876 = vmul.f32 %v862, %v761
    %v877 = vmul.f32 %v862, %v763
    %v878 = vmul.f32 %v862, %v765
    %v879 = vmul.f32 %v862, %v767
    %v880 = vmul.f32 %v862, %v769
    %v881 = vmul.f32 %v862, %v771
    %v882 = vmul.f32 %v862, %v773
    %v883 = vmul.f32 %v862, %v775
    %v884 = vmul.f32 %v862, %v777
    %v885 = vmul.f32 %v862, %v779
    %v886 = vmul.f32 %v862, %v781
    %v887 = vmul.f32 %v862, %v783
    %v888 = vmul.f32 %v862, %v785
    %v889 = vmul.f32 %v862, %v787
    %v890 = vmul.f32 %v862, %v789
    %v891 = vmul.f32 %v862, %v791
    %v892 = vmul.f32 %v862, %v793
    %v893 = vmul.f32 %v862, %v795
    %v894 = vmul.f32 %v862, %v797
    %v895 = vmul.f32 %v862, %v799
    %v896 = vmul.f32 %v862, %v801
    %v897 = vmul.f32 %v862, %v803
    %v898 = vmul.f32 %v862, %v805
    %v899 = vmul.f32 %v862, %v807
    %v900 = vmul.f32 %v862, %v809
    %v901 = vmul.f32 %v862, %v811
    %v902 = vmul.f32 %v862, %v813
    %v903 = vmul.f32 %v862, %v815
    %v904 = vmul.f32 %v862, %v817
    %v905 = vmul.f32 %v862, %v819
    %v906 = vmul.f32 %v862, %v821
    %v907 = vmul.f32 %v862, %v823
    %v908 = vmul.f32 %v862, %v825
    %v909 = vmul.f32 %v862, %v827
    %v910 = vmul.f32 %v862, %v829
    %v911 = vmul.f32 %v862, %v831
    %v912 = vmul.f32 %v862, %v833
    %v913 = vmul.f32 %v862, %v835
    %v914 = vmul.f32 %v862, %v837
    %v915 = vmul.f32 %v862, %v839
    %v916 = vmul.f32 %v862, %v841
    %v917 = vmul.f32 %v862, %v843
    %v918 = vmul.f32 %v862, %v845
    %v919 = vmul.f32 %v862, %v847
    %v920 = vmul.f32 %v862, %v849
    %v921 = vmul.f32 %v862, %v851
    %v922 = vmul.f32 %v862, %v853
    %v923 = vmul.f32 %v862, %v855
    %v924 = vmul.f32 %v862, %v857
    %v925 = vmul.f32 %v862, %v859
    %v926 = vmul.f32 %v862, %v861
    %v927 = vadd.f32 %v669, %v863
    %v928 = vadd.f32 %v670, %v864
    %v929 = vadd.f32 %v671, %v865
    %v930 = vadd.f32 %v672, %v866
    %v931 = vadd.f32 %v673, %v867
    %v932 = vadd.f32 %v674, %v868
    %v933 = vadd.f32 %v675, %v869
    %v934 = vadd.f32 %v676, %v870
    %v935 = vadd.f32 %v677, %v871
    %v936 = vadd.f32 %v678, %v872
    %v937 = vadd.f32 %v679, %v873
    %v938 = vadd.f32 %v680, %v874
    %v939 = vadd.f32 %v681, %v875
    %v940 = vadd.f32 %v682, %v876
    %v941 = vadd.f32 %v683, %v877
    %v942 = vadd.f32 %v684, %v878
    %v943 = vadd.f32 %v685, %v879
    %v944 = vadd.f32 %v686, %v880
    %v945 = vadd.f32 %v687, %v881
    %v946 = vadd.f32 %v688, %v882
    %v947 = vadd.f32 %v689, %v883
    %v948 = vadd.f32 %v690, %v884
    %v949 = vadd.f32 %v691, %v885
    %v950 = vadd.f32 %v692, %v886
    %v951 = vadd.f32 %v693, %v887
    %v952 = vadd.f32 %v694, %v888
    %v953 = vadd.f32 %v695, %v889
    %v954 = vadd.f32 %v696, %v890
    %v955 = vadd.f32 %v697, %v891
    %v956 = vadd.f32 %v698, %v892
    %v957 = vadd.f32 %v699, %v893
    %v958 = vadd.f32 %v700, %v894
    %v959 = vadd.f32 %v701, %v895
    %v960 = vadd.f32 %v702, %v896
    %v961 = vadd.f32 %v703, %v897
    %v962 = vadd.f32 %v704, %v898
    %v963 = vadd.f32 %v705, %v899
    %v964 = vadd.f32 %v706, %v900
    %v965 = vadd.f32 %v707, %v901
    %v966 = vadd.f32 %v708, %v902
    %v967 = vadd.f32 %v709, %v903
    %v968 = vadd.f32 %v710, %v904
    %v969 = vadd.f32 %v711, %v905
    %v970 = vadd.f32 %v712, %v906
    %v971 = vadd.f32 %v713, %v907
    %v972 = vadd.f32 %v714, %v908
    %v973 = vadd.f32 %v715, %v909
    %v974 = vadd.f32 %v716, %v910
    %v975 = vadd.f32 %v717, %v911
    %v976 = vadd.f32 %v718, %v912
    %v977 = vadd.f32 %v719, %v913
    %v978 = vadd.f32 %v720, %v914
    %v979 = vadd.f32 %v721, %v915
    %v980 = vadd.f32 %v722, %v916
    %v981 = vadd.f32 %v723, %v917
    %v982 = vadd.f32 %v724, %v918
    %v983 = vadd.f32 %v725, %v919
    %v984 = vadd.f32 %v726, %v920
    %v985 = vadd.f32 %v727, %v921
    %v986 = vadd.f32 %v728, %v922
    %v987 = vadd.f32 %v729, %v923
    %v988 = vadd.f32 %v730, %v924
    %v989 = vadd.f32 %v731, %v925
    %v990 = vadd.f32 %v732, %v926
    %vm991 = vcmask 523264
    %992 = vst.msk [vmem:[%s2] sm:$0xff] %vm991, %v927
    %993 = vst.msk [vmem:[%s2 + $0x8] sm:$0xff] %vm991, %v928
    %994 = vst.msk [vmem:[%s2 + $0x10] sm:$0xff] %vm991, %v929
    %995 = vst.msk [vmem:[%s2 + $0x18] sm:$0xff] %vm991, %v930
    %996 = vst.msk [vmem:[%s2 + $0x20] sm:$0xff] %vm991, %v931
    %997 = vst.msk [vmem:[%s2 + $0x28] sm:$0xff] %vm991, %v932
    %998 = vst.msk [vmem:[%s2 + $0x30] sm:$0xff] %vm991, %v933
    %999 = vst.msk [vmem:[%s2 + $0x38] sm:$0xff] %vm991, %v934
    %1000 = vst.msk [vmem:[%s2 + $0x40] sm:$0xff] %vm991, %v935
    %1001 = vst.msk [vmem:[%s2 + $0x48] sm:$0xff] %vm991, %v936
    %1002 = vst.msk [vmem:[%s2 + $0x50] sm:$0xff] %vm991, %v937
    %1003 = vst.msk [vmem:[%s2 + $0x58] sm:$0xff] %vm991, %v938
    %1004 = vst.msk [vmem:[%s2 + $0x60] sm:$0xff] %vm991, %v939
    %1005 = vst.msk [vmem:[%s2 + $0x68] sm:$0xff] %vm991, %v940
    %1006 = vst.msk [vmem:[%s2 + $0x70] sm:$0xff] %vm991, %v941
    %1007 = vst.msk [vmem:[%s2 + $0x78] sm:$0xff] %vm991, %v942
    %1008 = vst.msk [vmem:[%s2 + $0x80] sm:$0xff] %vm991, %v943
    %1009 = vst.msk [vmem:[%s2 + $0x88] sm:$0xff] %vm991, %v944
    %1010 = vst.msk [vmem:[%s2 + $0x90] sm:$0xff] %vm991, %v945
    %1011 = vst.msk [vmem:[%s2 + $0x98] sm:$0xff] %vm991, %v946
    %1012 = vst.msk [vmem:[%s2 + $0xa0] sm:$0xff] %vm991, %v947
    %1013 = vst.msk [vmem:[%s2 + $0xa8] sm:$0xff] %vm991, %v948
    %1014 = vst.msk [vmem:[%s2 + $0xb0] sm:$0xff] %vm991, %v949
    %1015 = vst.msk [vmem:[%s2 + $0xb8] sm:$0xff] %vm991, %v950
    %1016 = vst.msk [vmem:[%s2 + $0xc0] sm:$0xff] %vm991, %v951
    %1017 = vst.msk [vmem:[%s2 + $0xc8] sm:$0xff] %vm991, %v952
    %1018 = vst.msk [vmem:[%s2 + $0xd0] sm:$0xff] %vm991, %v953
    %1019 = vst.msk [vmem:[%s2 + $0xd8] sm:$0xff] %vm991, %v954
    %1020 = vst.msk [vmem:[%s2 + $0xe0] sm:$0xff] %vm991, %v955
    %1021 = vst.msk [vmem:[%s2 + $0xe8] sm:$0xff] %vm991, %v956
    %1022 = vst.msk [vmem:[%s2 + $0xf0] sm:$0xff] %vm991, %v957
    %1023 = vst.msk [vmem:[%s2 + $0xf8] sm:$0xff] %vm991, %v958
    %1024 = vst.msk [vmem:[%s2 + $0x100] sm:$0xff] %vm991, %v959
    %1025 = vst.msk [vmem:[%s2 + $0x108] sm:$0xff] %vm991, %v960
    %1026 = vst.msk [vmem:[%s2 + $0x110] sm:$0xff] %vm991, %v961
    %1027 = vst.msk [vmem:[%s2 + $0x118] sm:$0xff] %vm991, %v962
    %1028 = vst.msk [vmem:[%s2 + $0x120] sm:$0xff] %vm991, %v963
    %1029 = vst.msk [vmem:[%s2 + $0x128] sm:$0xff] %vm991, %v964
    %1030 = vst.msk [vmem:[%s2 + $0x130] sm:$0xff] %vm991, %v965
    %1031 = vst.msk [vmem:[%s2 + $0x138] sm:$0xff] %vm991, %v966
    %1032 = vst.msk [vmem:[%s2 + $0x140] sm:$0xff] %vm991, %v967
    %1033 = vst.msk [vmem:[%s2 + $0x148] sm:$0xff] %vm991, %v968
    %1034 = vst.msk [vmem:[%s2 + $0x150] sm:$0xff] %vm991, %v969
    %1035 = vst.msk [vmem:[%s2 + $0x158] sm:$0xff] %vm991, %v970
    %1036 = vst.msk [vmem:[%s2 + $0x160] sm:$0xff] %vm991, %v971
    %1037 = vst.msk [vmem:[%s2 + $0x168] sm:$0xff] %vm991, %v972
    %1038 = vst.msk [vmem:[%s2 + $0x170] sm:$0xff] %vm991, %v973
    %1039 = vst.msk [vmem:[%s2 + $0x178] sm:$0xff] %vm991, %v974
    %1040 = vst.msk [vmem:[%s2 + $0x180] sm:$0xff] %vm991, %v975
    %1041 = vst.msk [vmem:[%s2 + $0x188] sm:$0xff] %vm991, %v976
    %1042 = vst.msk [vmem:[%s2 + $0x190] sm:$0xff] %vm991, %v977
    %1043 = vst.msk [vmem:[%s2 + $0x198] sm:$0xff] %vm991, %v978
    %1044 = vst.msk [vmem:[%s2 + $0x1a0] sm:$0xff] %vm991, %v979
    %1045 = vst.msk [vmem:[%s2 + $0x1a8] sm:$0xff] %vm991, %v980
    %1046 = vst.msk [vmem:[%s2 + $0x1b0] sm:$0xff] %vm991, %v981
    %1047 = vst.msk [vmem:[%s2 + $0x1b8] sm:$0xff] %vm991, %v982
    %1048 = vst.msk [vmem:[%s2 + $0x1c0] sm:$0xff] %vm991, %v983
    %1049 = vst.msk [vmem:[%s2 + $0x1c8] sm:$0xff] %vm991, %v984
    %1050 = vst.msk [vmem:[%s2 + $0x1d0] sm:$0xff] %vm991, %v985
    %1051 = vst.msk [vmem:[%s2 + $0x1d8] sm:$0xff] %vm991, %v986
    %1052 = vst.msk [vmem:[%s2 + $0x1e0] sm:$0xff] %vm991, %v987
    %1053 = vst.msk [vmem:[%s2 + $0x1e8] sm:$0xff] %vm991, %v988
    %1054 = vst.msk [vmem:[%s2 + $0x1f0] sm:$0xff] %vm991, %v989
    %1055 = vst.msk [vmem:[%s2 + $0x1f8] sm:$0xff] %vm991, %v990
    // Predicated region
    $region14: #{semantic_attention.3} parent=1 // pred_check
      _
    $region15: #{semantic_attention.3} parent=1 // pred_check_branch
      %1057 = sbr.rel (0) target = $region17
    $region16: #{semantic_attention.3} parent=1 // pred_region
      _
    $region17: #{semantic_attention.3} parent=1 // pred_fallthru
      _
    // Predicated region
    $region18: #{semantic_attention.3} parent=1 // pred_check
      _
    $region19: #{semantic_attention.3} parent=1 // pred_check_branch
      %1059 = sbr.rel (0) target = $region21
    $region20: #{semantic_attention.3} parent=1 // pred_region
      _
    $region21: #{semantic_attention.3} parent=1 // pred_fallthru
      _
    %1060 = vsyncpa [#allocation3], 1

// kernel: semantic_attention.2
$region0: #{semantic_attention.2}
  #allocation0 [shape = 'u32[]', space=smem, size = 0x4, offset = 0x4, fixed_abs, tag = 'smem constant byte address 0x4 - core index']
  #allocation1 [shape = 'u32[72,128]{1,0:T(1,128)}', space=vmem, size = 0x9000, scoped, tag = 'internal scratch']
  %s0 = inlined_call_operand.vmem [shape: f32[2048,64], index: 0, kind: input, shape index: {}]
  %s1 = inlined_call_operand.vmem [shape: f32[64,128], index: 1, kind: input, shape index: {}]
  %s2 = inlined_call_operand.vmem [shape: f32[1,128], index: 2, kind: input, shape index: {}]
  %s3 = inlined_call_operand.vmem [shape: f32[1,8,128], index: 3, kind: output, shape index: {}]
  %s4 = sld [smem:[#allocation0]]
  $region26: #{semantic_attention.2} parent=0
    _
  %s6 = ssub.s32 1, %s4
  %s7 = scalar_select 0, %s6, %s4
  // Predicated region
  $region2: #{semantic_attention.2} parent=0 // pred_check
    _
  $region3: #{semantic_attention.2} parent=0 // pred_check_branch
    %9 = sbr.rel (0) target = $region5
  $region4: #{semantic_attention.2} parent=0 // pred_region
    %s10 = sadd.s32 0, 0
    %s11 = smul.u32 256, %s10
    %p12 = scmp.lt.s32.totalorder %s11, 255
    %s13 = scalar_select %p12, %s11, 255
    %s14 = smul.addr %s13, 8
    %s15 = scalar_lea.vmem %s0, %s14
    %s16 = sadd.s32 0, 0
    %s17 = smul.u32 256, %s16
  $region5: #{semantic_attention.2} parent=0 // pred_fallthru
    _
  // Predicated region
  $region6: #{semantic_attention.2} parent=0 // pred_check
    _
  $region7: #{semantic_attention.2} parent=0 // pred_check_branch
    %19 = sbr.rel (0) target = $region9
  $region8: #{semantic_attention.2} parent=0 // pred_region
    _
  $region9: #{semantic_attention.2} parent=0 // pred_fallthru
    _
  // Predicated region
  $region10: #{semantic_attention.2} parent=0 // pred_check
    _
  $region11: #{semantic_attention.2} parent=0 // pred_check_branch
    %21 = sbr.rel (0) target = $region13
  $region12: #{semantic_attention.2} parent=0 // pred_region
    _
  $region13: #{semantic_attention.2} parent=0 // pred_fallthru
    _
  %s22 = sadd.s32 0, 0
  %s23 = smul.u32 256, %s22
  %p24 = scmp.lt.s32.totalorder %s23, 255
  %s25 = scalar_select %p24, %s23, 255
  %s26 = smul.addr %s25, 8
  %s27 = scalar_lea.vmem %s0, %s26
  %s28 = sadd.s32 0, 0
  %s29 = smul.u32 256, %s28
  %p30 = scmp.lt.s32.totalorder %s29, 255
  %s31 = scalar_select %p30, %s29, 255
  %s32 = smul.addr %s31, 8
  %s33 = scalar_lea.vmem %s0, %s32
  %s34 = sadd.s32 0, 0
  %s35 = smul.u32 256, %s34
  %p36 = scmp.eq.s32.totalorder 0, 0
  // Predicated region
  $region14: #{semantic_attention.2} parent=0 // pred_check
    %p37 = pneg %p36
  $region15: #{semantic_attention.2} parent=0 // pred_check_branch
    %39 = sbr.rel (%p37) target = $region17
  $region16: #{semantic_attention.2} parent=0 // pred_region
    %40 = vst [vmem:[%s3] sm:$0xff] 0.0
  $region17: #{semantic_attention.2} parent=0 // pred_fallthru
    _
  %v41 = vld [vmem:[%s33] sm:$0xff]
  %v42 = vld [vmem:[%s33 + $0x8] sm:$0xff]
  %v43 = vld [vmem:[%s33 + $0x10] sm:$0xff]
  %v44 = vld [vmem:[%s33 + $0x18] sm:$0xff]
  %v45 = vld [vmem:[%s33 + $0x20] sm:$0xff]
  %v46 = vld [vmem:[%s33 + $0x28] sm:$0xff]
  %v47 = vld [vmem:[%s33 + $0x30] sm:$0xff]
  %v48 = vld [vmem:[%s33 + $0x38] sm:$0xff]
  %v49 = vld [vmem:[%s33 + $0x40] sm:$0xff]
  %v50 = vld [vmem:[%s33 + $0x48] sm:$0xff]
  %v51 = vld [vmem:[%s33 + $0x50] sm:$0xff]
  %v52 = vld [vmem:[%s33 + $0x58] sm:$0xff]
  %v53 = vld [vmem:[%s33 + $0x60] sm:$0xff]
  %v54 = vld [vmem:[%s33 + $0x68] sm:$0xff]
  %v55 = vld [vmem:[%s33 + $0x70] sm:$0xff]
  %v56 = vld [vmem:[%s33 + $0x78] sm:$0xff]
  %v57 = vld [vmem:[%s33 + $0x80] sm:$0xff]
  %v58 = vld [vmem:[%s33 + $0x88] sm:$0xff]
  %v59 = vld [vmem:[%s33 + $0x90] sm:$0xff]
  %v60 = vld [vmem:[%s33 + $0x98] sm:$0xff]
  %v61 = vld [vmem:[%s33 + $0xa0] sm:$0xff]
  %v62 = vld [vmem:[%s33 + $0xa8] sm:$0xff]
  %v63 = vld [vmem:[%s33 + $0xb0] sm:$0xff]
  %v64 = vld [vmem:[%s33 + $0xb8] sm:$0xff]
  %v65 = vld [vmem:[%s33 + $0xc0] sm:$0xff]
  %v66 = vld [vmem:[%s33 + $0xc8] sm:$0xff]
  %v67 = vld [vmem:[%s33 + $0xd0] sm:$0xff]
  %v68 = vld [vmem:[%s33 + $0xd8] sm:$0xff]
  %v69 = vld [vmem:[%s33 + $0xe0] sm:$0xff]
  %v70 = vld [vmem:[%s33 + $0xe8] sm:$0xff]
  %v71 = vld [vmem:[%s33 + $0xf0] sm:$0xff]
  %v72 = vld [vmem:[%s33 + $0xf8] sm:$0xff]
  %v73 = vld [vmem:[%s33 + $0x100] sm:$0xff]
  %v74 = vld [vmem:[%s33 + $0x108] sm:$0xff]
  %v75 = vld [vmem:[%s33 + $0x110] sm:$0xff]
  %v76 = vld [vmem:[%s33 + $0x118] sm:$0xff]
  %v77 = vld [vmem:[%s33 + $0x120] sm:$0xff]
  %v78 = vld [vmem:[%s33 + $0x128] sm:$0xff]
  %v79 = vld [vmem:[%s33 + $0x130] sm:$0xff]
  %v80 = vld [vmem:[%s33 + $0x138] sm:$0xff]
  %v81 = vld [vmem:[%s33 + $0x140] sm:$0xff]
  %v82 = vld [vmem:[%s33 + $0x148] sm:$0xff]
  %v83 = vld [vmem:[%s33 + $0x150] sm:$0xff]
  %v84 = vld [vmem:[%s33 + $0x158] sm:$0xff]
  %v85 = vld [vmem:[%s33 + $0x160] sm:$0xff]
  %v86 = vld [vmem:[%s33 + $0x168] sm:$0xff]
  %v87 = vld [vmem:[%s33 + $0x170] sm:$0xff]
  %v88 = vld [vmem:[%s33 + $0x178] sm:$0xff]
  %v89 = vld [vmem:[%s33 + $0x180] sm:$0xff]
  %v90 = vld [vmem:[%s33 + $0x188] sm:$0xff]
  %v91 = vld [vmem:[%s33 + $0x190] sm:$0xff]
  %v92 = vld [vmem:[%s33 + $0x198] sm:$0xff]
  %v93 = vld [vmem:[%s33 + $0x1a0] sm:$0xff]
  %v94 = vld [vmem:[%s33 + $0x1a8] sm:$0xff]
  %v95 = vld [vmem:[%s33 + $0x1b0] sm:$0xff]
  %v96 = vld [vmem:[%s33 + $0x1b8] sm:$0xff]
  %v97 = vld [vmem:[%s33 + $0x1c0] sm:$0xff]
  %v98 = vld [vmem:[%s33 + $0x1c8] sm:$0xff]
  %v99 = vld [vmem:[%s33 + $0x1d0] sm:$0xff]
  %v100 = vld [vmem:[%s33 + $0x1d8] sm:$0xff]
  %v101 = vld [vmem:[%s33 + $0x1e0] sm:$0xff]
  %v102 = vld [vmem:[%s33 + $0x1e8] sm:$0xff]
  %v103 = vld [vmem:[%s33 + $0x1f0] sm:$0xff]
  %v104 = vld [vmem:[%s33 + $0x1f8] sm:$0xff]
  %v105 = vld [vmem:[%s33 + $0x200] sm:$0xff]
  %v106 = vld [vmem:[%s33 + $0x208] sm:$0xff]
  %v107 = vld [vmem:[%s33 + $0x210] sm:$0xff]
  %v108 = vld [vmem:[%s33 + $0x218] sm:$0xff]
  %v109 = vld [vmem:[%s33 + $0x220] sm:$0xff]
  %v110 = vld [vmem:[%s33 + $0x228] sm:$0xff]
  %v111 = vld [vmem:[%s33 + $0x230] sm:$0xff]
  %v112 = vld [vmem:[%s33 + $0x238] sm:$0xff]
  %v113 = vld [vmem:[%s33 + $0x240] sm:$0xff]
  %v114 = vld [vmem:[%s33 + $0x248] sm:$0xff]
  %v115 = vld [vmem:[%s33 + $0x250] sm:$0xff]
  %v116 = vld [vmem:[%s33 + $0x258] sm:$0xff]
  %v117 = vld [vmem:[%s33 + $0x260] sm:$0xff]
  %v118 = vld [vmem:[%s33 + $0x268] sm:$0xff]
  %v119 = vld [vmem:[%s33 + $0x270] sm:$0xff]
  %v120 = vld [vmem:[%s33 + $0x278] sm:$0xff]
  %v121 = vld [vmem:[%s33 + $0x280] sm:$0xff]
  %v122 = vld [vmem:[%s33 + $0x288] sm:$0xff]
  %v123 = vld [vmem:[%s33 + $0x290] sm:$0xff]
  %v124 = vld [vmem:[%s33 + $0x298] sm:$0xff]
  %v125 = vld [vmem:[%s33 + $0x2a0] sm:$0xff]
  %v126 = vld [vmem:[%s33 + $0x2a8] sm:$0xff]
  %v127 = vld [vmem:[%s33 + $0x2b0] sm:$0xff]
  %v128 = vld [vmem:[%s33 + $0x2b8] sm:$0xff]
  %v129 = vld [vmem:[%s33 + $0x2c0] sm:$0xff]
  %v130 = vld [vmem:[%s33 + $0x2c8] sm:$0xff]
  %v131 = vld [vmem:[%s33 + $0x2d0] sm:$0xff]
  %v132 = vld [vmem:[%s33 + $0x2d8] sm:$0xff]
  %v133 = vld [vmem:[%s33 + $0x2e0] sm:$0xff]
  %v134 = vld [vmem:[%s33 + $0x2e8] sm:$0xff]
  %v135 = vld [vmem:[%s33 + $0x2f0] sm:$0xff]
  %v136 = vld [vmem:[%s33 + $0x2f8] sm:$0xff]
  %v137 = vld [vmem:[%s33 + $0x300] sm:$0xff]
  %v138 = vld [vmem:[%s33 + $0x308] sm:$0xff]
  %v139 = vld [vmem:[%s33 + $0x310] sm:$0xff]
  %v140 = vld [vmem:[%s33 + $0x318] sm:$0xff]
  %v141 = vld [vmem:[%s33 + $0x320] sm:$0xff]
  %v142 = vld [vmem:[%s33 + $0x328] sm:$0xff]
  %v143 = vld [vmem:[%s33 + $0x330] sm:$0xff]
  %v144 = vld [vmem:[%s33 + $0x338] sm:$0xff]
  %v145 = vld [vmem:[%s33 + $0x340] sm:$0xff]
  %v146 = vld [vmem:[%s33 + $0x348] sm:$0xff]
  %v147 = vld [vmem:[%s33 + $0x350] sm:$0xff]
  %v148 = vld [vmem:[%s33 + $0x358] sm:$0xff]
  %v149 = vld [vmem:[%s33 + $0x360] sm:$0xff]
  %v150 = vld [vmem:[%s33 + $0x368] sm:$0xff]
  %v151 = vld [vmem:[%s33 + $0x370] sm:$0xff]
  %v152 = vld [vmem:[%s33 + $0x378] sm:$0xff]
  %v153 = vld [vmem:[%s33 + $0x380] sm:$0xff]
  %v154 = vld [vmem:[%s33 + $0x388] sm:$0xff]
  %v155 = vld [vmem:[%s33 + $0x390] sm:$0xff]
  %v156 = vld [vmem:[%s33 + $0x398] sm:$0xff]
  %v157 = vld [vmem:[%s33 + $0x3a0] sm:$0xff]
  %v158 = vld [vmem:[%s33 + $0x3a8] sm:$0xff]
  %v159 = vld [vmem:[%s33 + $0x3b0] sm:$0xff]
  %v160 = vld [vmem:[%s33 + $0x3b8] sm:$0xff]
  %v161 = vld [vmem:[%s33 + $0x3c0] sm:$0xff]
  %v162 = vld [vmem:[%s33 + $0x3c8] sm:$0xff]
  %v163 = vld [vmem:[%s33 + $0x3d0] sm:$0xff]
  %v164 = vld [vmem:[%s33 + $0x3d8] sm:$0xff]
  %v165 = vld [vmem:[%s33 + $0x3e0] sm:$0xff]
  %v166 = vld [vmem:[%s33 + $0x3e8] sm:$0xff]
  %v167 = vld [vmem:[%s33 + $0x3f0] sm:$0xff]
  %v168 = vld [vmem:[%s33 + $0x3f8] sm:$0xff]
  %v169 = vld [vmem:[%s33 + $0x400] sm:$0xff]
  %v170 = vld [vmem:[%s33 + $0x408] sm:$0xff]
  %v171 = vld [vmem:[%s33 + $0x410] sm:$0xff]
  %v172 = vld [vmem:[%s33 + $0x418] sm:$0xff]
  %v173 = vld [vmem:[%s33 + $0x420] sm:$0xff]
  %v174 = vld [vmem:[%s33 + $0x428] sm:$0xff]
  %v175 = vld [vmem:[%s33 + $0x430] sm:$0xff]
  %v176 = vld [vmem:[%s33 + $0x438] sm:$0xff]
  %v177 = vld [vmem:[%s33 + $0x440] sm:$0xff]
  %v178 = vld [vmem:[%s33 + $0x448] sm:$0xff]
  %v179 = vld [vmem:[%s33 + $0x450] sm:$0xff]
  %v180 = vld [vmem:[%s33 + $0x458] sm:$0xff]
  %v181 = vld [vmem:[%s33 + $0x460] sm:$0xff]
  %v182 = vld [vmem:[%s33 + $0x468] sm:$0xff]
  %v183 = vld [vmem:[%s33 + $0x470] sm:$0xff]
  %v184 = vld [vmem:[%s33 + $0x478] sm:$0xff]
  %v185 = vld [vmem:[%s33 + $0x480] sm:$0xff]
  %v186 = vld [vmem:[%s33 + $0x488] sm:$0xff]
  %v187 = vld [vmem:[%s33 + $0x490] sm:$0xff]
  %v188 = vld [vmem:[%s33 + $0x498] sm:$0xff]
  %v189 = vld [vmem:[%s33 + $0x4a0] sm:$0xff]
  %v190 = vld [vmem:[%s33 + $0x4a8] sm:$0xff]
  %v191 = vld [vmem:[%s33 + $0x4b0] sm:$0xff]
  %v192 = vld [vmem:[%s33 + $0x4b8] sm:$0xff]
  %v193 = vld [vmem:[%s33 + $0x4c0] sm:$0xff]
  %v194 = vld [vmem:[%s33 + $0x4c8] sm:$0xff]
  %v195 = vld [vmem:[%s33 + $0x4d0] sm:$0xff]
  %v196 = vld [vmem:[%s33 + $0x4d8] sm:$0xff]
  %v197 = vld [vmem:[%s33 + $0x4e0] sm:$0xff]
  %v198 = vld [vmem:[%s33 + $0x4e8] sm:$0xff]
  %v199 = vld [vmem:[%s33 + $0x4f0] sm:$0xff]
  %v200 = vld [vmem:[%s33 + $0x4f8] sm:$0xff]
  %v201 = vld [vmem:[%s33 + $0x500] sm:$0xff]
  %v202 = vld [vmem:[%s33 + $0x508] sm:$0xff]
  %v203 = vld [vmem:[%s33 + $0x510] sm:$0xff]
  %v204 = vld [vmem:[%s33 + $0x518] sm:$0xff]
  %v205 = vld [vmem:[%s33 + $0x520] sm:$0xff]
  %v206 = vld [vmem:[%s33 + $0x528] sm:$0xff]
  %v207 = vld [vmem:[%s33 + $0x530] sm:$0xff]
  %v208 = vld [vmem:[%s33 + $0x538] sm:$0xff]
  %v209 = vld [vmem:[%s33 + $0x540] sm:$0xff]
  %v210 = vld [vmem:[%s33 + $0x548] sm:$0xff]
  %v211 = vld [vmem:[%s33 + $0x550] sm:$0xff]
  %v212 = vld [vmem:[%s33 + $0x558] sm:$0xff]
  %v213 = vld [vmem:[%s33 + $0x560] sm:$0xff]
  %v214 = vld [vmem:[%s33 + $0x568] sm:$0xff]
  %v215 = vld [vmem:[%s33 + $0x570] sm:$0xff]
  %v216 = vld [vmem:[%s33 + $0x578] sm:$0xff]
  %v217 = vld [vmem:[%s33 + $0x580] sm:$0xff]
  %v218 = vld [vmem:[%s33 + $0x588] sm:$0xff]
  %v219 = vld [vmem:[%s33 + $0x590] sm:$0xff]
  %v220 = vld [vmem:[%s33 + $0x598] sm:$0xff]
  %v221 = vld [vmem:[%s33 + $0x5a0] sm:$0xff]
  %v222 = vld [vmem:[%s33 + $0x5a8] sm:$0xff]
  %v223 = vld [vmem:[%s33 + $0x5b0] sm:$0xff]
  %v224 = vld [vmem:[%s33 + $0x5b8] sm:$0xff]
  %v225 = vld [vmem:[%s33 + $0x5c0] sm:$0xff]
  %v226 = vld [vmem:[%s33 + $0x5c8] sm:$0xff]
  %v227 = vld [vmem:[%s33 + $0x5d0] sm:$0xff]
  %v228 = vld [vmem:[%s33 + $0x5d8] sm:$0xff]
  %v229 = vld [vmem:[%s33 + $0x5e0] sm:$0xff]
  %v230 = vld [vmem:[%s33 + $0x5e8] sm:$0xff]
  %v231 = vld [vmem:[%s33 + $0x5f0] sm:$0xff]
  %v232 = vld [vmem:[%s33 + $0x5f8] sm:$0xff]
  %v233 = vld [vmem:[%s33 + $0x600] sm:$0xff]
  %v234 = vld [vmem:[%s33 + $0x608] sm:$0xff]
  %v235 = vld [vmem:[%s33 + $0x610] sm:$0xff]
  %v236 = vld [vmem:[%s33 + $0x618] sm:$0xff]
  %v237 = vld [vmem:[%s33 + $0x620] sm:$0xff]
  %v238 = vld [vmem:[%s33 + $0x628] sm:$0xff]
  %v239 = vld [vmem:[%s33 + $0x630] sm:$0xff]
  %v240 = vld [vmem:[%s33 + $0x638] sm:$0xff]
  %v241 = vld [vmem:[%s33 + $0x640] sm:$0xff]
  %v242 = vld [vmem:[%s33 + $0x648] sm:$0xff]
  %v243 = vld [vmem:[%s33 + $0x650] sm:$0xff]
  %v244 = vld [vmem:[%s33 + $0x658] sm:$0xff]
  %v245 = vld [vmem:[%s33 + $0x660] sm:$0xff]
  %v246 = vld [vmem:[%s33 + $0x668] sm:$0xff]
  %v247 = vld [vmem:[%s33 + $0x670] sm:$0xff]
  %v248 = vld [vmem:[%s33 + $0x678] sm:$0xff]
  %v249 = vld [vmem:[%s33 + $0x680] sm:$0xff]
  %v250 = vld [vmem:[%s33 + $0x688] sm:$0xff]
  %v251 = vld [vmem:[%s33 + $0x690] sm:$0xff]
  %v252 = vld [vmem:[%s33 + $0x698] sm:$0xff]
  %v253 = vld [vmem:[%s33 + $0x6a0] sm:$0xff]
  %v254 = vld [vmem:[%s33 + $0x6a8] sm:$0xff]
  %v255 = vld [vmem:[%s33 + $0x6b0] sm:$0xff]
  %v256 = vld [vmem:[%s33 + $0x6b8] sm:$0xff]
  %v257 = vld [vmem:[%s33 + $0x6c0] sm:$0xff]
  %v258 = vld [vmem:[%s33 + $0x6c8] sm:$0xff]
  %v259 = vld [vmem:[%s33 + $0x6d0] sm:$0xff]
  %v260 = vld [vmem:[%s33 + $0x6d8] sm:$0xff]
  %v261 = vld [vmem:[%s33 + $0x6e0] sm:$0xff]
  %v262 = vld [vmem:[%s33 + $0x6e8] sm:$0xff]
  %v263 = vld [vmem:[%s33 + $0x6f0] sm:$0xff]
  %v264 = vld [vmem:[%s33 + $0x6f8] sm:$0xff]
  %v265 = vld [vmem:[%s33 + $0x700] sm:$0xff]
  %v266 = vld [vmem:[%s33 + $0x708] sm:$0xff]
  %v267 = vld [vmem:[%s33 + $0x710] sm:$0xff]
  %v268 = vld [vmem:[%s33 + $0x718] sm:$0xff]
  %v269 = vld [vmem:[%s33 + $0x720] sm:$0xff]
  %v270 = vld [vmem:[%s33 + $0x728] sm:$0xff]
  %v271 = vld [vmem:[%s33 + $0x730] sm:$0xff]
  %v272 = vld [vmem:[%s33 + $0x738] sm:$0xff]
  %v273 = vld [vmem:[%s33 + $0x740] sm:$0xff]
  %v274 = vld [vmem:[%s33 + $0x748] sm:$0xff]
  %v275 = vld [vmem:[%s33 + $0x750] sm:$0xff]
  %v276 = vld [vmem:[%s33 + $0x758] sm:$0xff]
  %v277 = vld [vmem:[%s33 + $0x760] sm:$0xff]
  %v278 = vld [vmem:[%s33 + $0x768] sm:$0xff]
  %v279 = vld [vmem:[%s33 + $0x770] sm:$0xff]
  %v280 = vld [vmem:[%s33 + $0x778] sm:$0xff]
  %v281 = vld [vmem:[%s33 + $0x780] sm:$0xff]
  %v282 = vld [vmem:[%s33 + $0x788] sm:$0xff]
  %v283 = vld [vmem:[%s33 + $0x790] sm:$0xff]
  %v284 = vld [vmem:[%s33 + $0x798] sm:$0xff]
  %v285 = vld [vmem:[%s33 + $0x7a0] sm:$0xff]
  %v286 = vld [vmem:[%s33 + $0x7a8] sm:$0xff]
  %v287 = vld [vmem:[%s33 + $0x7b0] sm:$0xff]
  %v288 = vld [vmem:[%s33 + $0x7b8] sm:$0xff]
  %v289 = vld [vmem:[%s33 + $0x7c0] sm:$0xff]
  %v290 = vld [vmem:[%s33 + $0x7c8] sm:$0xff]
  %v291 = vld [vmem:[%s33 + $0x7d0] sm:$0xff]
  %v292 = vld [vmem:[%s33 + $0x7d8] sm:$0xff]
  %v293 = vld [vmem:[%s33 + $0x7e0] sm:$0xff]
  %v294 = vld [vmem:[%s33 + $0x7e8] sm:$0xff]
  %v295 = vld [vmem:[%s33 + $0x7f0] sm:$0xff]
  %v296 = vld [vmem:[%s33 + $0x7f8] sm:$0xff]
  %v297 = vld [vmem:[%s1] sm:$0xff]
  %v298 = vld [vmem:[%s1 + $0x8] sm:$0xff]
  %v299 = vld [vmem:[%s1 + $0x10] sm:$0xff]
  %v300 = vld [vmem:[%s1 + $0x18] sm:$0xff]
  %v301 = vld [vmem:[%s1 + $0x20] sm:$0xff]
  %v302 = vld [vmem:[%s1 + $0x28] sm:$0xff]
  %v303 = vld [vmem:[%s1 + $0x30] sm:$0xff]
  %v304 = vld [vmem:[%s1 + $0x38] sm:$0xff]
  %v305 = vld [vmem:[%s2] sm:$0x1]
  %v307 = vperm.slane %v305, 0
  %vm309 = vcmask 523264
  %v311 = vsel %vm309, %v41, 0
  %v314 = vsel %vm309, %v42, 0
  %v317 = vsel %vm309, %v43, 0
  %v320 = vsel %vm309, %v44, 0
  %v323 = vsel %vm309, %v45, 0
  %v326 = vsel %vm309, %v46, 0
  %v329 = vsel %vm309, %v47, 0
  %v332 = vsel %vm309, %v48, 0
  %v335 = vsel %vm309, %v49, 0
  %v338 = vsel %vm309, %v50, 0
  %v341 = vsel %vm309, %v51, 0
  %v344 = vsel %vm309, %v52, 0
  %v347 = vsel %vm309, %v53, 0
  %v350 = vsel %vm309, %v54, 0
  %v353 = vsel %vm309, %v55, 0
  %v356 = vsel %vm309, %v56, 0
  %v359 = vsel %vm309, %v57, 0
  %v362 = vsel %vm309, %v58, 0
  %v365 = vsel %vm309, %v59, 0
  %v368 = vsel %vm309, %v60, 0
  %v371 = vsel %vm309, %v61, 0
  %v374 = vsel %vm309, %v62, 0
  %v377 = vsel %vm309, %v63, 0
  %v380 = vsel %vm309, %v64, 0
  %v383 = vsel %vm309, %v65, 0
  %v386 = vsel %vm309, %v66, 0
  %v389 = vsel %vm309, %v67, 0
  %v392 = vsel %vm309, %v68, 0
  %v395 = vsel %vm309, %v69, 0
  %v398 = vsel %vm309, %v70, 0
  %v401 = vsel %vm309, %v71, 0
  %v404 = vsel %vm309, %v72, 0
  %v407 = vsel %vm309, %v73, 0
  %v410 = vsel %vm309, %v74, 0
  %v413 = vsel %vm309, %v75, 0
  %v416 = vsel %vm309, %v76, 0
  %v419 = vsel %vm309, %v77, 0
  %v422 = vsel %vm309, %v78, 0
  %v425 = vsel %vm309, %v79, 0
  %v428 = vsel %vm309, %v80, 0
  %v431 = vsel %vm309, %v81, 0
  %v434 = vsel %vm309, %v82, 0
  %v437 = vsel %vm309, %v83, 0
  %v440 = vsel %vm309, %v84, 0
  %v443 = vsel %vm309, %v85, 0
  %v446 = vsel %vm309, %v86, 0
  %v449 = vsel %vm309, %v87, 0
  %v452 = vsel %vm309, %v88, 0
  %v455 = vsel %vm309, %v89, 0
  %v458 = vsel %vm309, %v90, 0
  %v461 = vsel %vm309, %v91, 0
  %v464 = vsel %vm309, %v92, 0
  %v467 = vsel %vm309, %v93, 0
  %v470 = vsel %vm309, %v94, 0
  %v473 = vsel %vm309, %v95, 0
  %v476 = vsel %vm309, %v96, 0
  %v479 = vsel %vm309, %v97, 0
  %v482 = vsel %vm309, %v98, 0
  %v485 = vsel %vm309, %v99, 0
  %v488 = vsel %vm309, %v100, 0
  %v491 = vsel %vm309, %v101, 0
  %v494 = vsel %vm309, %v102, 0
  %v497 = vsel %vm309, %v103, 0
  %v500 = vsel %vm309, %v104, 0
  %v503 = vsel %vm309, %v105, 0
  %v506 = vsel %vm309, %v106, 0
  %v509 = vsel %vm309, %v107, 0
  %v512 = vsel %vm309, %v108, 0
  %v515 = vsel %vm309, %v109, 0
  %v518 = vsel %vm309, %v110, 0
  %v521 = vsel %vm309, %v111, 0
  %v524 = vsel %vm309, %v112, 0
  %v527 = vsel %vm309, %v113, 0
  %v530 = vsel %vm309, %v114, 0
  %v533 = vsel %vm309, %v115, 0
  %v536 = vsel %vm309, %v116, 0
  %v539 = vsel %vm309, %v117, 0
  %v542 = vsel %vm309, %v118, 0
  %v545 = vsel %vm309, %v119, 0
  %v548 = vsel %vm309, %v120, 0
  %v551 = vsel %vm309, %v121, 0
  %v554 = vsel %vm309, %v122, 0
  %v557 = vsel %vm309, %v123, 0
  %v560 = vsel %vm309, %v124, 0
  %v563 = vsel %vm309, %v125, 0
  %v566 = vsel %vm309, %v126, 0
  %v569 = vsel %vm309, %v127, 0
  %v572 = vsel %vm309, %v128, 0
  %v575 = vsel %vm309, %v129, 0
  %v578 = vsel %vm309, %v130, 0
  %v581 = vsel %vm309, %v131, 0
  %v584 = vsel %vm309, %v132, 0
  %v587 = vsel %vm309, %v133, 0
  %v590 = vsel %vm309, %v134, 0
  %v593 = vsel %vm309, %v135, 0
  %v596 = vsel %vm309, %v136, 0
  %v599 = vsel %vm309, %v137, 0
  %v602 = vsel %vm309, %v138, 0
  %v605 = vsel %vm309, %v139, 0
  %v608 = vsel %vm309, %v140, 0
  %v611 = vsel %vm309, %v141, 0
  %v614 = vsel %vm309, %v142, 0
  %v617 = vsel %vm309, %v143, 0
  %v620 = vsel %vm309, %v144, 0
  %v623 = vsel %vm309, %v145, 0
  %v626 = vsel %vm309, %v146, 0
  %v629 = vsel %vm309, %v147, 0
  %v632 = vsel %vm309, %v148, 0
  %v635 = vsel %vm309, %v149, 0
  %v638 = vsel %vm309, %v150, 0
  %v641 = vsel %vm309, %v151, 0
  %v644 = vsel %vm309, %v152, 0
  %v647 = vsel %vm309, %v153, 0
  %v650 = vsel %vm309, %v154, 0
  %v653 = vsel %vm309, %v155, 0
  %v656 = vsel %vm309, %v156, 0
  %v659 = vsel %vm309, %v157, 0
  %v662 = vsel %vm309, %v158, 0
  %v665 = vsel %vm309, %v159, 0
  %v668 = vsel %vm309, %v160, 0
  %v671 = vsel %vm309, %v161, 0
  %v674 = vsel %vm309, %v162, 0
  %v677 = vsel %vm309, %v163, 0
  %v680 = vsel %vm309, %v164, 0
  %v683 = vsel %vm309, %v165, 0
  %v686 = vsel %vm309, %v166, 0
  %v689 = vsel %vm309, %v167, 0
  %v692 = vsel %vm309, %v168, 0
  %v695 = vsel %vm309, %v169, 0
  %v698 = vsel %vm309, %v170, 0
  %v701 = vsel %vm309, %v171, 0
  %v704 = vsel %vm309, %v172, 0
  %v707 = vsel %vm309, %v173, 0
  %v710 = vsel %vm309, %v174, 0
  %v713 = vsel %vm309, %v175, 0
  %v716 = vsel %vm309, %v176, 0
  %v719 = vsel %vm309, %v177, 0
  %v722 = vsel %vm309, %v178, 0
  %v725 = vsel %vm309, %v179, 0
  %v728 = vsel %vm309, %v180, 0
  %v731 = vsel %vm309, %v181, 0
  %v734 = vsel %vm309, %v182, 0
  %v737 = vsel %vm309, %v183, 0
  %v740 = vsel %vm309, %v184, 0
  %v743 = vsel %vm309, %v185, 0
  %v746 = vsel %vm309, %v186, 0
  %v749 = vsel %vm309, %v187, 0
  %v752 = vsel %vm309, %v188, 0
  %v755 = vsel %vm309, %v189, 0
  %v758 = vsel %vm309, %v190, 0
  %v761 = vsel %vm309, %v191, 0
  %v764 = vsel %vm309, %v192, 0
  %v767 = vsel %vm309, %v193, 0
  %v770 = vsel %vm309, %v194, 0
  %v773 = vsel %vm309, %v195, 0
  %v776 = vsel %vm309, %v196, 0
  %v779 = vsel %vm309, %v197, 0
  %v782 = vsel %vm309, %v198, 0
  %v785 = vsel %vm309, %v199, 0
  %v788 = vsel %vm309, %v200, 0
  %v791 = vsel %vm309, %v201, 0
  %v794 = vsel %vm309, %v202, 0
  %v797 = vsel %vm309, %v203, 0
  %v800 = vsel %vm309, %v204, 0
  %v803 = vsel %vm309, %v205, 0
  %v806 = vsel %vm309, %v206, 0
  %v809 = vsel %vm309, %v207, 0
  %v812 = vsel %vm309, %v208, 0
  %v815 = vsel %vm309, %v209, 0
  %v818 = vsel %vm309, %v210, 0
  %v821 = vsel %vm309, %v211, 0
  %v824 = vsel %vm309, %v212, 0
  %v827 = vsel %vm309, %v213, 0
  %v830 = vsel %vm309, %v214, 0
  %v833 = vsel %vm309, %v215, 0
  %v836 = vsel %vm309, %v216, 0
  %v839 = vsel %vm309, %v217, 0
  %v842 = vsel %vm309, %v218, 0
  %v845 = vsel %vm309, %v219, 0
  %v848 = vsel %vm309, %v220, 0
  %v851 = vsel %vm309, %v221, 0
  %v854 = vsel %vm309, %v222, 0
  %v857 = vsel %vm309, %v223, 0
  %v860 = vsel %vm309, %v224, 0
  %v863 = vsel %vm309, %v225, 0
  %v866 = vsel %vm309, %v226, 0
  %v869 = vsel %vm309, %v227, 0
  %v872 = vsel %vm309, %v228, 0
  %v875 = vsel %vm309, %v229, 0
  %v878 = vsel %vm309, %v230, 0
  %v881 = vsel %vm309, %v231, 0
  %v884 = vsel %vm309, %v232, 0
  %v887 = vsel %vm309, %v233, 0
  %v890 = vsel %vm309, %v234, 0
  %v893 = vsel %vm309, %v235, 0
  %v896 = vsel %vm309, %v236, 0
  %v899 = vsel %vm309, %v237, 0
  %v902 = vsel %vm309, %v238, 0
  %v905 = vsel %vm309, %v239, 0
  %v908 = vsel %vm309, %v240, 0
  %v911 = vsel %vm309, %v241, 0
  %v914 = vsel %vm309, %v242, 0
  %v917 = vsel %vm309, %v243, 0
  %v920 = vsel %vm309, %v244, 0
  %v923 = vsel %vm309, %v245, 0
  %v926 = vsel %vm309, %v246, 0
  %v929 = vsel %vm309, %v247, 0
  %v932 = vsel %vm309, %v248, 0
  %v935 = vsel %vm309, %v249, 0
  %v938 = vsel %vm309, %v250, 0
  %v941 = vsel %vm309, %v251, 0
  %v944 = vsel %vm309, %v252, 0
  %v947 = vsel %vm309, %v253, 0
  %v950 = vsel %vm309, %v254, 0
  %v953 = vsel %vm309, %v255, 0
  %v956 = vsel %vm309, %v256, 0
  %v959 = vsel %vm309, %v257, 0
  %v962 = vsel %vm309, %v258, 0
  %v965 = vsel %vm309, %v259, 0
  %v968 = vsel %vm309, %v260, 0
  %v971 = vsel %vm309, %v261, 0
  %v974 = vsel %vm309, %v262, 0
  %v977 = vsel %vm309, %v263, 0
  %v980 = vsel %vm309, %v264, 0
  %v983 = vsel %vm309, %v265, 0
  %v986 = vsel %vm309, %v266, 0
  %v989 = vsel %vm309, %v267, 0
  %v992 = vsel %vm309, %v268, 0
  %v995 = vsel %vm309, %v269, 0
  %v998 = vsel %vm309, %v270, 0
  %v1001 = vsel %vm309, %v271, 0
  %v1004 = vsel %vm309, %v272, 0
  %v1007 = vsel %vm309, %v273, 0
  %v1010 = vsel %vm309, %v274, 0
  %v1013 = vsel %vm309, %v275, 0
  %v1016 = vsel %vm309, %v276, 0
  %v1019 = vsel %vm309, %v277, 0
  %v1022 = vsel %vm309, %v278, 0
  %v1025 = vsel %vm309, %v279, 0
  %v1028 = vsel %vm309, %v280, 0
  %v1031 = vsel %vm309, %v281, 0
  %v1034 = vsel %vm309, %v282, 0
  %v1037 = vsel %vm309, %v283, 0
  %v1040 = vsel %vm309, %v284, 0
  %v1043 = vsel %vm309, %v285, 0
  %v1046 = vsel %vm309, %v286, 0
  %v1049 = vsel %vm309, %v287, 0
  %v1052 = vsel %vm309, %v288, 0
  %v1055 = vsel %vm309, %v289, 0
  %v1058 = vsel %vm309, %v290, 0
  %v1061 = vsel %vm309, %v291, 0
  %v1064 = vsel %vm309, %v292, 0
  %v1067 = vsel %vm309, %v293, 0
  %v1070 = vsel %vm309, %v294, 0
  %v1073 = vsel %vm309, %v295, 0
  %v1076 = vsel %vm309, %v296, 0
  %1078 = vmatpush.msra.mxu0 0.0
  %1079 = vmatpush.msra.mxu0 0.0
  %1080 = vmatpush.msra.mxu0 0.0
  %1081 = vmatpush.msra.mxu0 0.0
  %1082 = vmatpush.msra.mxu0 0.0
  %1083 = vmatpush.msra.mxu0 0.0
  %1084 = vmatpush.msra.mxu0 0.0
  %1085 = vmatpush.msra.mxu0 0.0
  %1086 = vmatpush.msra.mxu0 %v304
  %1087 = vmatpush.msra.mxu0 %v303
  %1088 = vmatpush.msra.mxu0 %v302
  %1089 = vmatpush.msra.mxu0 %v301
  %1090 = vmatpush.msra.mxu0 %v300
  %1091 = vmatpush.msra.mxu0 %v299
  %1092 = vmatpush.msra.mxu0 %v298
  %1093 = vmatpush.msra.mxu0 %v297
  %1094 = vmatmul.f32.gmra.mxu0 %v311
  %v1095 = vpop.f32.mrf.mxu0
  %v1096 = vadd.f32 %v307, %v1095
  %1097 = vmatmul.f32.gmra.mxu0 %v314
  %v1098 = vpop.f32.mrf.mxu0
  %v1099 = vadd.f32 %v307, %v1098
  %1100 = vmatmul.f32.gmra.mxu0 %v317
  %v1101 = vpop.f32.mrf.mxu0
  %v1102 = vadd.f32 %v307, %v1101
  %1103 = vmatmul.f32.gmra.mxu0 %v320
  %v1104 = vpop.f32.mrf.mxu0
  %v1105 = vadd.f32 %v307, %v1104
  %1106 = vmatmul.f32.gmra.mxu0 %v323
  %v1107 = vpop.f32.mrf.mxu0
  %v1108 = vadd.f32 %v307, %v1107
  %1109 = vmatmul.f32.gmra.mxu0 %v326
  %v1110 = vpop.f32.mrf.mxu0
  %v1111 = vadd.f32 %v307, %v1110
  %1112 = vmatmul.f32.gmra.mxu0 %v329
  %v1113 = vpop.f32.mrf.mxu0
  %v1114 = vadd.f32 %v307, %v1113
  %1115 = vmatmul.f32.gmra.mxu0 %v332
  %v1116 = vpop.f32.mrf.mxu0
  %v1117 = vadd.f32 %v307, %v1116
  %1118 = vmatmul.f32.gmra.mxu0 %v335
  %v1119 = vpop.f32.mrf.mxu0
  %v1120 = vadd.f32 %v307, %v1119
  %1121 = vmatmul.f32.gmra.mxu0 %v338
  %v1122 = vpop.f32.mrf.mxu0
  %v1123 = vadd.f32 %v307, %v1122
  %1124 = vmatmul.f32.gmra.mxu0 %v341
  %v1125 = vpop.f32.mrf.mxu0
  %v1126 = vadd.f32 %v307, %v1125
  %1127 = vmatmul.f32.gmra.mxu0 %v344
  %v1128 = vpop.f32.mrf.mxu0
  %v1129 = vadd.f32 %v307, %v1128
  %1130 = vmatmul.f32.gmra.mxu0 %v347
  %v1131 = vpop.f32.mrf.mxu0
  %v1132 = vadd.f32 %v307, %v1131
  %1133 = vmatmul.f32.gmra.mxu0 %v350
  %v1134 = vpop.f32.mrf.mxu0
  %v1135 = vadd.f32 %v307, %v1134
  %1136 = vmatmul.f32.gmra.mxu0 %v353
  %v1137 = vpop.f32.mrf.mxu0
  %v1138 = vadd.f32 %v307, %v1137
  %1139 = vmatmul.f32.gmra.mxu0 %v356
  %v1140 = vpop.f32.mrf.mxu0
  %v1141 = vadd.f32 %v307, %v1140
  %1142 = vmatmul.f32.gmra.mxu0 %v359
  %v1143 = vpop.f32.mrf.mxu0
  %v1144 = vadd.f32 %v307, %v1143
  %1145 = vmatmul.f32.gmra.mxu0 %v362
  %v1146 = vpop.f32.mrf.mxu0
  %v1147 = vadd.f32 %v307, %v1146
  %1148 = vmatmul.f32.gmra.mxu0 %v365
  %v1149 = vpop.f32.mrf.mxu0
  %v1150 = vadd.f32 %v307, %v1149
  %1151 = vmatmul.f32.gmra.mxu0 %v368
  %v1152 = vpop.f32.mrf.mxu0
  %v1153 = vadd.f32 %v307, %v1152
  %1154 = vmatmul.f32.gmra.mxu0 %v371
  %v1155 = vpop.f32.mrf.mxu0
  %v1156 = vadd.f32 %v307, %v1155
  %1157 = vmatmul.f32.gmra.mxu0 %v374
  %v1158 = vpop.f32.mrf.mxu0
  %v1159 = vadd.f32 %v307, %v1158
  %1160 = vmatmul.f32.gmra.mxu0 %v377
  %v1161 = vpop.f32.mrf.mxu0
  %v1162 = vadd.f32 %v307, %v1161
  %1163 = vmatmul.f32.gmra.mxu0 %v380
  %v1164 = vpop.f32.mrf.mxu0
  %v1165 = vadd.f32 %v307, %v1164
  %1166 = vmatmul.f32.gmra.mxu0 %v383
  %v1167 = vpop.f32.mrf.mxu0
  %v1168 = vadd.f32 %v307, %v1167
  %1169 = vmatmul.f32.gmra.mxu0 %v386
  %v1170 = vpop.f32.mrf.mxu0
  %v1171 = vadd.f32 %v307, %v1170
  %1172 = vmatmul.f32.gmra.mxu0 %v389
  %v1173 = vpop.f32.mrf.mxu0
  %v1174 = vadd.f32 %v307, %v1173
  %1175 = vmatmul.f32.gmra.mxu0 %v392
  %v1176 = vpop.f32.mrf.mxu0
  %v1177 = vadd.f32 %v307, %v1176
  %1178 = vmatmul.f32.gmra.mxu0 %v395
  %v1179 = vpop.f32.mrf.mxu0
  %v1180 = vadd.f32 %v307, %v1179
  %1181 = vmatmul.f32.gmra.mxu0 %v398
  %v1182 = vpop.f32.mrf.mxu0
  %v1183 = vadd.f32 %v307, %v1182
  %1184 = vmatmul.f32.gmra.mxu0 %v401
  %v1185 = vpop.f32.mrf.mxu0
  %v1186 = vadd.f32 %v307, %v1185
  %1187 = vmatmul.f32.gmra.mxu0 %v404
  %v1188 = vpop.f32.mrf.mxu0
  %v1189 = vadd.f32 %v307, %v1188
  %1190 = vmatmul.f32.gmra.mxu0 %v407
  %v1191 = vpop.f32.mrf.mxu0
  %v1192 = vadd.f32 %v307, %v1191
  %1193 = vmatmul.f32.gmra.mxu0 %v410
  %v1194 = vpop.f32.mrf.mxu0
  %v1195 = vadd.f32 %v307, %v1194
  %1196 = vmatmul.f32.gmra.mxu0 %v413
  %v1197 = vpop.f32.mrf.mxu0
  %v1198 = vadd.f32 %v307, %v1197
  %1199 = vmatmul.f32.gmra.mxu0 %v416
  %v1200 = vpop.f32.mrf.mxu0
  %v1201 = vadd.f32 %v307, %v1200
  %1202 = vmatmul.f32.gmra.mxu0 %v419
  %v1203 = vpop.f32.mrf.mxu0
  %v1204 = vadd.f32 %v307, %v1203
  %1205 = vmatmul.f32.gmra.mxu0 %v422
  %v1206 = vpop.f32.mrf.mxu0
  %v1207 = vadd.f32 %v307, %v1206
  %1208 = vmatmul.f32.gmra.mxu0 %v425
  %v1209 = vpop.f32.mrf.mxu0
  %v1210 = vadd.f32 %v307, %v1209
  %1211 = vmatmul.f32.gmra.mxu0 %v428
  %v1212 = vpop.f32.mrf.mxu0
  %v1213 = vadd.f32 %v307, %v1212
  %1214 = vmatmul.f32.gmra.mxu0 %v431
  %v1215 = vpop.f32.mrf.mxu0
  %v1216 = vadd.f32 %v307, %v1215
  %1217 = vmatmul.f32.gmra.mxu0 %v434
  %v1218 = vpop.f32.mrf.mxu0
  %v1219 = vadd.f32 %v307, %v1218
  %1220 = vmatmul.f32.gmra.mxu0 %v437
  %v1221 = vpop.f32.mrf.mxu0
  %v1222 = vadd.f32 %v307, %v1221
  %1223 = vmatmul.f32.gmra.mxu0 %v440
  %v1224 = vpop.f32.mrf.mxu0
  %v1225 = vadd.f32 %v307, %v1224
  %1226 = vmatmul.f32.gmra.mxu0 %v443
  %v1227 = vpop.f32.mrf.mxu0
  %v1228 = vadd.f32 %v307, %v1227
  %1229 = vmatmul.f32.gmra.mxu0 %v446
  %v1230 = vpop.f32.mrf.mxu0
  %v1231 = vadd.f32 %v307, %v1230
  %1232 = vmatmul.f32.gmra.mxu0 %v449
  %v1233 = vpop.f32.mrf.mxu0
  %v1234 = vadd.f32 %v307, %v1233
  %1235 = vmatmul.f32.gmra.mxu0 %v452
  %v1236 = vpop.f32.mrf.mxu0
  %v1237 = vadd.f32 %v307, %v1236
  %1238 = vmatmul.f32.gmra.mxu0 %v455
  %v1239 = vpop.f32.mrf.mxu0
  %v1240 = vadd.f32 %v307, %v1239
  %1241 = vmatmul.f32.gmra.mxu0 %v458
  %v1242 = vpop.f32.mrf.mxu0
  %v1243 = vadd.f32 %v307, %v1242
  %1244 = vmatmul.f32.gmra.mxu0 %v461
  %v1245 = vpop.f32.mrf.mxu0
  %v1246 = vadd.f32 %v307, %v1245
  %1247 = vmatmul.f32.gmra.mxu0 %v464
  %v1248 = vpop.f32.mrf.mxu0
  %v1249 = vadd.f32 %v307, %v1248
  %1250 = vmatmul.f32.gmra.mxu0 %v467
  %v1251 = vpop.f32.mrf.mxu0
  %v1252 = vadd.f32 %v307, %v1251
  %1253 = vmatmul.f32.gmra.mxu0 %v470
  %v1254 = vpop.f32.mrf.mxu0
  %v1255 = vadd.f32 %v307, %v1254
  %1256 = vmatmul.f32.gmra.mxu0 %v473
  %v1257 = vpop.f32.mrf.mxu0
  %v1258 = vadd.f32 %v307, %v1257
  %1259 = vmatmul.f32.gmra.mxu0 %v476
  %v1260 = vpop.f32.mrf.mxu0
  %v1261 = vadd.f32 %v307, %v1260
  %1262 = vmatmul.f32.gmra.mxu0 %v479
  %v1263 = vpop.f32.mrf.mxu0
  %v1264 = vadd.f32 %v307, %v1263
  %1265 = vmatmul.f32.gmra.mxu0 %v482
  %v1266 = vpop.f32.mrf.mxu0
  %v1267 = vadd.f32 %v307, %v1266
  %1268 = vmatmul.f32.gmra.mxu0 %v485
  %v1269 = vpop.f32.mrf.mxu0
  %v1270 = vadd.f32 %v307, %v1269
  %1271 = vmatmul.f32.gmra.mxu0 %v488
  %v1272 = vpop.f32.mrf.mxu0
  %v1273 = vadd.f32 %v307, %v1272
  %1274 = vmatmul.f32.gmra.mxu0 %v491
  %v1275 = vpop.f32.mrf.mxu0
  %v1276 = vadd.f32 %v307, %v1275
  %1277 = vmatmul.f32.gmra.mxu0 %v494
  %v1278 = vpop.f32.mrf.mxu0
  %v1279 = vadd.f32 %v307, %v1278
  %1280 = vmatmul.f32.gmra.mxu0 %v497
  %v1281 = vpop.f32.mrf.mxu0
  %v1282 = vadd.f32 %v307, %v1281
  %1283 = vmatmul.f32.gmra.mxu0 %v500
  %v1284 = vpop.f32.mrf.mxu0
  %v1285 = vadd.f32 %v307, %v1284
  %1286 = vmatmul.f32.gmra.mxu0 %v503
  %v1287 = vpop.f32.mrf.mxu0
  %v1288 = vadd.f32 %v307, %v1287
  %1289 = vmatmul.f32.gmra.mxu0 %v506
  %v1290 = vpop.f32.mrf.mxu0
  %v1291 = vadd.f32 %v307, %v1290
  %1292 = vmatmul.f32.gmra.mxu0 %v509
  %v1293 = vpop.f32.mrf.mxu0
  %v1294 = vadd.f32 %v307, %v1293
  %1295 = vmatmul.f32.gmra.mxu0 %v512
  %v1296 = vpop.f32.mrf.mxu0
  %v1297 = vadd.f32 %v307, %v1296
  %1298 = vmatmul.f32.gmra.mxu0 %v515
  %v1299 = vpop.f32.mrf.mxu0
  %v1300 = vadd.f32 %v307, %v1299
  %1301 = vmatmul.f32.gmra.mxu0 %v518
  %v1302 = vpop.f32.mrf.mxu0
  %v1303 = vadd.f32 %v307, %v1302
  %1304 = vmatmul.f32.gmra.mxu0 %v521
  %v1305 = vpop.f32.mrf.mxu0
  %v1306 = vadd.f32 %v307, %v1305
  %1307 = vmatmul.f32.gmra.mxu0 %v524
  %v1308 = vpop.f32.mrf.mxu0
  %v1309 = vadd.f32 %v307, %v1308
  %1310 = vmatmul.f32.gmra.mxu0 %v527
  %v1311 = vpop.f32.mrf.mxu0
  %v1312 = vadd.f32 %v307, %v1311
  %1313 = vmatmul.f32.gmra.mxu0 %v530
  %v1314 = vpop.f32.mrf.mxu0
  %v1315 = vadd.f32 %v307, %v1314
  %1316 = vmatmul.f32.gmra.mxu0 %v533
  %v1317 = vpop.f32.mrf.mxu0
  %v1318 = vadd.f32 %v307, %v1317
  %1319 = vmatmul.f32.gmra.mxu0 %v536
  %v1320 = vpop.f32.mrf.mxu0
  %v1321 = vadd.f32 %v307, %v1320
  %1322 = vmatmul.f32.gmra.mxu0 %v539
  %v1323 = vpop.f32.mrf.mxu0
  %v1324 = vadd.f32 %v307, %v1323
  %1325 = vmatmul.f32.gmra.mxu0 %v542
  %v1326 = vpop.f32.mrf.mxu0
  %v1327 = vadd.f32 %v307, %v1326
  %1328 = vmatmul.f32.gmra.mxu0 %v545
  %v1329 = vpop.f32.mrf.mxu0
  %v1330 = vadd.f32 %v307, %v1329
  %1331 = vmatmul.f32.gmra.mxu0 %v548
  %v1332 = vpop.f32.mrf.mxu0
  %v1333 = vadd.f32 %v307, %v1332
  %1334 = vmatmul.f32.gmra.mxu0 %v551
  %v1335 = vpop.f32.mrf.mxu0
  %v1336 = vadd.f32 %v307, %v1335
  %1337 = vmatmul.f32.gmra.mxu0 %v554
  %v1338 = vpop.f32.mrf.mxu0
  %v1339 = vadd.f32 %v307, %v1338
  %1340 = vmatmul.f32.gmra.mxu0 %v557
  %v1341 = vpop.f32.mrf.mxu0
  %v1342 = vadd.f32 %v307, %v1341
  %1343 = vmatmul.f32.gmra.mxu0 %v560
  %v1344 = vpop.f32.mrf.mxu0
  %v1345 = vadd.f32 %v307, %v1344
  %1346 = vmatmul.f32.gmra.mxu0 %v563
  %v1347 = vpop.f32.mrf.mxu0
  %v1348 = vadd.f32 %v307, %v1347
  %1349 = vmatmul.f32.gmra.mxu0 %v566
  %v1350 = vpop.f32.mrf.mxu0
  %v1351 = vadd.f32 %v307, %v1350
  %1352 = vmatmul.f32.gmra.mxu0 %v569
  %v1353 = vpop.f32.mrf.mxu0
  %v1354 = vadd.f32 %v307, %v1353
  %1355 = vmatmul.f32.gmra.mxu0 %v572
  %v1356 = vpop.f32.mrf.mxu0
  %v1357 = vadd.f32 %v307, %v1356
  %1358 = vmatmul.f32.gmra.mxu0 %v575
  %v1359 = vpop.f32.mrf.mxu0
  %v1360 = vadd.f32 %v307, %v1359
  %1361 = vmatmul.f32.gmra.mxu0 %v578
  %v1362 = vpop.f32.mrf.mxu0
  %v1363 = vadd.f32 %v307, %v1362
  %1364 = vmatmul.f32.gmra.mxu0 %v581
  %v1365 = vpop.f32.mrf.mxu0
  %v1366 = vadd.f32 %v307, %v1365
  %1367 = vmatmul.f32.gmra.mxu0 %v584
  %v1368 = vpop.f32.mrf.mxu0
  %v1369 = vadd.f32 %v307, %v1368
  %1370 = vmatmul.f32.gmra.mxu0 %v587
  %v1371 = vpop.f32.mrf.mxu0
  %v1372 = vadd.f32 %v307, %v1371
  %1373 = vmatmul.f32.gmra.mxu0 %v590
  %v1374 = vpop.f32.mrf.mxu0
  %v1375 = vadd.f32 %v307, %v1374
  %1376 = vmatmul.f32.gmra.mxu0 %v593
  %v1377 = vpop.f32.mrf.mxu0
  %v1378 = vadd.f32 %v307, %v1377
  %1379 = vmatmul.f32.gmra.mxu0 %v596
  %v1380 = vpop.f32.mrf.mxu0
  %v1381 = vadd.f32 %v307, %v1380
  %1382 = vmatmul.f32.gmra.mxu0 %v599
  %v1383 = vpop.f32.mrf.mxu0
  %v1384 = vadd.f32 %v307, %v1383
  %1385 = vmatmul.f32.gmra.mxu0 %v602
  %v1386 = vpop.f32.mrf.mxu0
  %v1387 = vadd.f32 %v307, %v1386
  %1388 = vmatmul.f32.gmra.mxu0 %v605
  %v1389 = vpop.f32.mrf.mxu0
  %v1390 = vadd.f32 %v307, %v1389
  %1391 = vmatmul.f32.gmra.mxu0 %v608
  %v1392 = vpop.f32.mrf.mxu0
  %v1393 = vadd.f32 %v307, %v1392
  %1394 = vmatmul.f32.gmra.mxu0 %v611
  %v1395 = vpop.f32.mrf.mxu0
  %v1396 = vadd.f32 %v307, %v1395
  %1397 = vmatmul.f32.gmra.mxu0 %v614
  %v1398 = vpop.f32.mrf.mxu0
  %v1399 = vadd.f32 %v307, %v1398
  %1400 = vmatmul.f32.gmra.mxu0 %v617
  %v1401 = vpop.f32.mrf.mxu0
  %v1402 = vadd.f32 %v307, %v1401
  %1403 = vmatmul.f32.gmra.mxu0 %v620
  %v1404 = vpop.f32.mrf.mxu0
  %v1405 = vadd.f32 %v307, %v1404
  %1406 = vmatmul.f32.gmra.mxu0 %v623
  %v1407 = vpop.f32.mrf.mxu0
  %v1408 = vadd.f32 %v307, %v1407
  %1409 = vmatmul.f32.gmra.mxu0 %v626
  %v1410 = vpop.f32.mrf.mxu0
  %v1411 = vadd.f32 %v307, %v1410
  %1412 = vmatmul.f32.gmra.mxu0 %v629
  %v1413 = vpop.f32.mrf.mxu0
  %v1414 = vadd.f32 %v307, %v1413
  %1415 = vmatmul.f32.gmra.mxu0 %v632
  %v1416 = vpop.f32.mrf.mxu0
  %v1417 = vadd.f32 %v307, %v1416
  %1418 = vmatmul.f32.gmra.mxu0 %v635
  %v1419 = vpop.f32.mrf.mxu0
  %v1420 = vadd.f32 %v307, %v1419
  %1421 = vmatmul.f32.gmra.mxu0 %v638
  %v1422 = vpop.f32.mrf.mxu0
  %v1423 = vadd.f32 %v307, %v1422
  %1424 = vmatmul.f32.gmra.mxu0 %v641
  %v1425 = vpop.f32.mrf.mxu0
  %v1426 = vadd.f32 %v307, %v1425
  %1427 = vmatmul.f32.gmra.mxu0 %v644
  %v1428 = vpop.f32.mrf.mxu0
  %v1429 = vadd.f32 %v307, %v1428
  %1430 = vmatmul.f32.gmra.mxu0 %v647
  %v1431 = vpop.f32.mrf.mxu0
  %v1432 = vadd.f32 %v307, %v1431
  %1433 = vmatmul.f32.gmra.mxu0 %v650
  %v1434 = vpop.f32.mrf.mxu0
  %v1435 = vadd.f32 %v307, %v1434
  %1436 = vmatmul.f32.gmra.mxu0 %v653
  %v1437 = vpop.f32.mrf.mxu0
  %v1438 = vadd.f32 %v307, %v1437
  %1439 = vmatmul.f32.gmra.mxu0 %v656
  %v1440 = vpop.f32.mrf.mxu0
  %v1441 = vadd.f32 %v307, %v1440
  %1442 = vmatmul.f32.gmra.mxu0 %v659
  %v1443 = vpop.f32.mrf.mxu0
  %v1444 = vadd.f32 %v307, %v1443
  %1445 = vmatmul.f32.gmra.mxu0 %v662
  %v1446 = vpop.f32.mrf.mxu0
  %v1447 = vadd.f32 %v307, %v1446
  %1448 = vmatmul.f32.gmra.mxu0 %v665
  %v1449 = vpop.f32.mrf.mxu0
  %v1450 = vadd.f32 %v307, %v1449
  %1451 = vmatmul.f32.gmra.mxu0 %v668
  %v1452 = vpop.f32.mrf.mxu0
  %v1453 = vadd.f32 %v307, %v1452
  %1454 = vmatmul.f32.gmra.mxu0 %v671
  %v1455 = vpop.f32.mrf.mxu0
  %v1456 = vadd.f32 %v307, %v1455
  %1457 = vmatmul.f32.gmra.mxu0 %v674
  %v1458 = vpop.f32.mrf.mxu0
  %v1459 = vadd.f32 %v307, %v1458
  %1460 = vmatmul.f32.gmra.mxu0 %v677
  %v1461 = vpop.f32.mrf.mxu0
  %v1462 = vadd.f32 %v307, %v1461
  %1463 = vmatmul.f32.gmra.mxu0 %v680
  %v1464 = vpop.f32.mrf.mxu0
  %v1465 = vadd.f32 %v307, %v1464
  %1466 = vmatmul.f32.gmra.mxu0 %v683
  %v1467 = vpop.f32.mrf.mxu0
  %v1468 = vadd.f32 %v307, %v1467
  %1469 = vmatmul.f32.gmra.mxu0 %v686
  %v1470 = vpop.f32.mrf.mxu0
  %v1471 = vadd.f32 %v307, %v1470
  %1472 = vmatmul.f32.gmra.mxu0 %v689
  %v1473 = vpop.f32.mrf.mxu0
  %v1474 = vadd.f32 %v307, %v1473
  %1475 = vmatmul.f32.gmra.mxu0 %v692
  %v1476 = vpop.f32.mrf.mxu0
  %v1477 = vadd.f32 %v307, %v1476
  %1478 = vmatmul.f32.gmra.mxu0 %v695
  %v1479 = vpop.f32.mrf.mxu0
  %v1480 = vadd.f32 %v307, %v1479
  %1481 = vmatmul.f32.gmra.mxu0 %v698
  %v1482 = vpop.f32.mrf.mxu0
  %v1483 = vadd.f32 %v307, %v1482
  %1484 = vmatmul.f32.gmra.mxu0 %v701
  %v1485 = vpop.f32.mrf.mxu0
  %v1486 = vadd.f32 %v307, %v1485
  %1487 = vmatmul.f32.gmra.mxu0 %v704
  %v1488 = vpop.f32.mrf.mxu0
  %v1489 = vadd.f32 %v307, %v1488
  %1490 = vmatmul.f32.gmra.mxu0 %v707
  %v1491 = vpop.f32.mrf.mxu0
  %v1492 = vadd.f32 %v307, %v1491
  %1493 = vmatmul.f32.gmra.mxu0 %v710
  %v1494 = vpop.f32.mrf.mxu0
  %v1495 = vadd.f32 %v307, %v1494
  %1496 = vmatmul.f32.gmra.mxu0 %v713
  %v1497 = vpop.f32.mrf.mxu0
  %v1498 = vadd.f32 %v307, %v1497
  %1499 = vmatmul.f32.gmra.mxu0 %v716
  %v1500 = vpop.f32.mrf.mxu0
  %v1501 = vadd.f32 %v307, %v1500
  %1502 = vmatmul.f32.gmra.mxu0 %v719
  %v1503 = vpop.f32.mrf.mxu0
  %v1504 = vadd.f32 %v307, %v1503
  %1505 = vmatmul.f32.gmra.mxu0 %v722
  %v1506 = vpop.f32.mrf.mxu0
  %v1507 = vadd.f32 %v307, %v1506
  %1508 = vmatmul.f32.gmra.mxu0 %v725
  %v1509 = vpop.f32.mrf.mxu0
  %v1510 = vadd.f32 %v307, %v1509
  %1511 = vmatmul.f32.gmra.mxu0 %v728
  %v1512 = vpop.f32.mrf.mxu0
  %v1513 = vadd.f32 %v307, %v1512
  %1514 = vmatmul.f32.gmra.mxu0 %v731
  %v1515 = vpop.f32.mrf.mxu0
  %v1516 = vadd.f32 %v307, %v1515
  %1517 = vmatmul.f32.gmra.mxu0 %v734
  %v1518 = vpop.f32.mrf.mxu0
  %v1519 = vadd.f32 %v307, %v1518
  %1520 = vmatmul.f32.gmra.mxu0 %v737
  %v1521 = vpop.f32.mrf.mxu0
  %v1522 = vadd.f32 %v307, %v1521
  %1523 = vmatmul.f32.gmra.mxu0 %v740
  %v1524 = vpop.f32.mrf.mxu0
  %v1525 = vadd.f32 %v307, %v1524
  %1526 = vmatmul.f32.gmra.mxu0 %v743
  %v1527 = vpop.f32.mrf.mxu0
  %v1528 = vadd.f32 %v307, %v1527
  %1529 = vmatmul.f32.gmra.mxu0 %v746
  %v1530 = vpop.f32.mrf.mxu0
  %v1531 = vadd.f32 %v307, %v1530
  %1532 = vmatmul.f32.gmra.mxu0 %v749
  %v1533 = vpop.f32.mrf.mxu0
  %v1534 = vadd.f32 %v307, %v1533
  %1535 = vmatmul.f32.gmra.mxu0 %v752
  %v1536 = vpop.f32.mrf.mxu0
  %v1537 = vadd.f32 %v307, %v1536
  %1538 = vmatmul.f32.gmra.mxu0 %v755
  %v1539 = vpop.f32.mrf.mxu0
  %v1540 = vadd.f32 %v307, %v1539
  %1541 = vmatmul.f32.gmra.mxu0 %v758
  %v1542 = vpop.f32.mrf.mxu0
  %v1543 = vadd.f32 %v307, %v1542
  %1544 = vmatmul.f32.gmra.mxu0 %v761
  %v1545 = vpop.f32.mrf.mxu0
  %v1546 = vadd.f32 %v307, %v1545
  %1547 = vmatmul.f32.gmra.mxu0 %v764
  %v1548 = vpop.f32.mrf.mxu0
  %v1549 = vadd.f32 %v307, %v1548
  %1550 = vmatmul.f32.gmra.mxu0 %v767
  %v1551 = vpop.f32.mrf.mxu0
  %v1552 = vadd.f32 %v307, %v1551
  %1553 = vmatmul.f32.gmra.mxu0 %v770
  %v1554 = vpop.f32.mrf.mxu0
  %v1555 = vadd.f32 %v307, %v1554
  %1556 = vmatmul.f32.gmra.mxu0 %v773
  %v1557 = vpop.f32.mrf.mxu0
  %v1558 = vadd.f32 %v307, %v1557
  %1559 = vmatmul.f32.gmra.mxu0 %v776
  %v1560 = vpop.f32.mrf.mxu0
  %v1561 = vadd.f32 %v307, %v1560
  %1562 = vmatmul.f32.gmra.mxu0 %v779
  %v1563 = vpop.f32.mrf.mxu0
  %v1564 = vadd.f32 %v307, %v1563
  %1565 = vmatmul.f32.gmra.mxu0 %v782
  %v1566 = vpop.f32.mrf.mxu0
  %v1567 = vadd.f32 %v307, %v1566
  %1568 = vmatmul.f32.gmra.mxu0 %v785
  %v1569 = vpop.f32.mrf.mxu0
  %v1570 = vadd.f32 %v307, %v1569
  %1571 = vmatmul.f32.gmra.mxu0 %v788
  %v1572 = vpop.f32.mrf.mxu0
  %v1573 = vadd.f32 %v307, %v1572
  %1574 = vmatmul.f32.gmra.mxu0 %v791
  %v1575 = vpop.f32.mrf.mxu0
  %v1576 = vadd.f32 %v307, %v1575
  %1577 = vmatmul.f32.gmra.mxu0 %v794
  %v1578 = vpop.f32.mrf.mxu0
  %v1579 = vadd.f32 %v307, %v1578
  %1580 = vmatmul.f32.gmra.mxu0 %v797
  %v1581 = vpop.f32.mrf.mxu0
  %v1582 = vadd.f32 %v307, %v1581
  %1583 = vmatmul.f32.gmra.mxu0 %v800
  %v1584 = vpop.f32.mrf.mxu0
  %v1585 = vadd.f32 %v307, %v1584
  %1586 = vmatmul.f32.gmra.mxu0 %v803
  %v1587 = vpop.f32.mrf.mxu0
  %v1588 = vadd.f32 %v307, %v1587
  %1589 = vmatmul.f32.gmra.mxu0 %v806
  %v1590 = vpop.f32.mrf.mxu0
  %v1591 = vadd.f32 %v307, %v1590
  %1592 = vmatmul.f32.gmra.mxu0 %v809
  %v1593 = vpop.f32.mrf.mxu0
  %v1594 = vadd.f32 %v307, %v1593
  %1595 = vmatmul.f32.gmra.mxu0 %v812
  %v1596 = vpop.f32.mrf.mxu0
  %v1597 = vadd.f32 %v307, %v1596
  %1598 = vmatmul.f32.gmra.mxu0 %v815
  %v1599 = vpop.f32.mrf.mxu0
  %v1600 = vadd.f32 %v307, %v1599
  %1601 = vmatmul.f32.gmra.mxu0 %v818
  %v1602 = vpop.f32.mrf.mxu0
  %v1603 = vadd.f32 %v307, %v1602
  %1604 = vmatmul.f32.gmra.mxu0 %v821
  %v1605 = vpop.f32.mrf.mxu0
  %v1606 = vadd.f32 %v307, %v1605
  %1607 = vmatmul.f32.gmra.mxu0 %v824
  %v1608 = vpop.f32.mrf.mxu0
  %v1609 = vadd.f32 %v307, %v1608
  %1610 = vmatmul.f32.gmra.mxu0 %v827
  %v1611 = vpop.f32.mrf.mxu0
  %v1612 = vadd.f32 %v307, %v1611
  %1613 = vmatmul.f32.gmra.mxu0 %v830
  %v1614 = vpop.f32.mrf.mxu0
  %v1615 = vadd.f32 %v307, %v1614
  %1616 = vmatmul.f32.gmra.mxu0 %v833
  %v1617 = vpop.f32.mrf.mxu0
  %v1618 = vadd.f32 %v307, %v1617
  %1619 = vmatmul.f32.gmra.mxu0 %v836
  %v1620 = vpop.f32.mrf.mxu0
  %v1621 = vadd.f32 %v307, %v1620
  %1622 = vmatmul.f32.gmra.mxu0 %v839
  %v1623 = vpop.f32.mrf.mxu0
  %v1624 = vadd.f32 %v307, %v1623
  %1625 = vmatmul.f32.gmra.mxu0 %v842
  %v1626 = vpop.f32.mrf.mxu0
  %v1627 = vadd.f32 %v307, %v1626
  %1628 = vmatmul.f32.gmra.mxu0 %v845
  %v1629 = vpop.f32.mrf.mxu0
  %v1630 = vadd.f32 %v307, %v1629
  %1631 = vmatmul.f32.gmra.mxu0 %v848
  %v1632 = vpop.f32.mrf.mxu0
  %v1633 = vadd.f32 %v307, %v1632
  %1634 = vmatmul.f32.gmra.mxu0 %v851
  %v1635 = vpop.f32.mrf.mxu0
  %v1636 = vadd.f32 %v307, %v1635
  %1637 = vmatmul.f32.gmra.mxu0 %v854
  %v1638 = vpop.f32.mrf.mxu0
  %v1639 = vadd.f32 %v307, %v1638
  %1640 = vmatmul.f32.gmra.mxu0 %v857
  %v1641 = vpop.f32.mrf.mxu0
  %v1642 = vadd.f32 %v307, %v1641
  %1643 = vmatmul.f32.gmra.mxu0 %v860
  %v1644 = vpop.f32.mrf.mxu0
  %v1645 = vadd.f32 %v307, %v1644
  %1646 = vmatmul.f32.gmra.mxu0 %v863
  %v1647 = vpop.f32.mrf.mxu0
  %v1648 = vadd.f32 %v307, %v1647
  %1649 = vmatmul.f32.gmra.mxu0 %v866
  %v1650 = vpop.f32.mrf.mxu0
  %v1651 = vadd.f32 %v307, %v1650
  %1652 = vmatmul.f32.gmra.mxu0 %v869
  %v1653 = vpop.f32.mrf.mxu0
  %v1654 = vadd.f32 %v307, %v1653
  %1655 = vmatmul.f32.gmra.mxu0 %v872
  %v1656 = vpop.f32.mrf.mxu0
  %v1657 = vadd.f32 %v307, %v1656
  %1658 = vmatmul.f32.gmra.mxu0 %v875
  %v1659 = vpop.f32.mrf.mxu0
  %v1660 = vadd.f32 %v307, %v1659
  %1661 = vmatmul.f32.gmra.mxu0 %v878
  %v1662 = vpop.f32.mrf.mxu0
  %v1663 = vadd.f32 %v307, %v1662
  %1664 = vmatmul.f32.gmra.mxu0 %v881
  %v1665 = vpop.f32.mrf.mxu0
  %v1666 = vadd.f32 %v307, %v1665
  %1667 = vmatmul.f32.gmra.mxu0 %v884
  %v1668 = vpop.f32.mrf.mxu0
  %v1669 = vadd.f32 %v307, %v1668
  %1670 = vmatmul.f32.gmra.mxu0 %v887
  %v1671 = vpop.f32.mrf.mxu0
  %v1672 = vadd.f32 %v307, %v1671
  %1673 = vmatmul.f32.gmra.mxu0 %v890
  %v1674 = vpop.f32.mrf.mxu0
  %v1675 = vadd.f32 %v307, %v1674
  %1676 = vmatmul.f32.gmra.mxu0 %v893
  %v1677 = vpop.f32.mrf.mxu0
  %v1678 = vadd.f32 %v307, %v1677
  %1679 = vmatmul.f32.gmra.mxu0 %v896
  %v1680 = vpop.f32.mrf.mxu0
  %v1681 = vadd.f32 %v307, %v1680
  %1682 = vmatmul.f32.gmra.mxu0 %v899
  %v1683 = vpop.f32.mrf.mxu0
  %v1684 = vadd.f32 %v307, %v1683
  %1685 = vmatmul.f32.gmra.mxu0 %v902
  %v1686 = vpop.f32.mrf.mxu0
  %v1687 = vadd.f32 %v307, %v1686
  %1688 = vmatmul.f32.gmra.mxu0 %v905
  %v1689 = vpop.f32.mrf.mxu0
  %v1690 = vadd.f32 %v307, %v1689
  %1691 = vmatmul.f32.gmra.mxu0 %v908
  %v1692 = vpop.f32.mrf.mxu0
  %v1693 = vadd.f32 %v307, %v1692
  %1694 = vmatmul.f32.gmra.mxu0 %v911
  %v1695 = vpop.f32.mrf.mxu0
  %v1696 = vadd.f32 %v307, %v1695
  %1697 = vmatmul.f32.gmra.mxu0 %v914
  %v1698 = vpop.f32.mrf.mxu0
  %v1699 = vadd.f32 %v307, %v1698
  %1700 = vmatmul.f32.gmra.mxu0 %v917
  %v1701 = vpop.f32.mrf.mxu0
  %v1702 = vadd.f32 %v307, %v1701
  %1703 = vmatmul.f32.gmra.mxu0 %v920
  %v1704 = vpop.f32.mrf.mxu0
  %v1705 = vadd.f32 %v307, %v1704
  %1706 = vmatmul.f32.gmra.mxu0 %v923
  %v1707 = vpop.f32.mrf.mxu0
  %v1708 = vadd.f32 %v307, %v1707
  %1709 = vmatmul.f32.gmra.mxu0 %v926
  %v1710 = vpop.f32.mrf.mxu0
  %v1711 = vadd.f32 %v307, %v1710
  %1712 = vmatmul.f32.gmra.mxu0 %v929
  %v1713 = vpop.f32.mrf.mxu0
  %v1714 = vadd.f32 %v307, %v1713
  %1715 = vmatmul.f32.gmra.mxu0 %v932
  %v1716 = vpop.f32.mrf.mxu0
  %v1717 = vadd.f32 %v307, %v1716
  %1718 = vmatmul.f32.gmra.mxu0 %v935
  %v1719 = vpop.f32.mrf.mxu0
  %v1720 = vadd.f32 %v307, %v1719
  %1721 = vmatmul.f32.gmra.mxu0 %v938
  %v1722 = vpop.f32.mrf.mxu0
  %v1723 = vadd.f32 %v307, %v1722
  %1724 = vmatmul.f32.gmra.mxu0 %v941
  %v1725 = vpop.f32.mrf.mxu0
  %v1726 = vadd.f32 %v307, %v1725
  %1727 = vmatmul.f32.gmra.mxu0 %v944
  %v1728 = vpop.f32.mrf.mxu0
  %v1729 = vadd.f32 %v307, %v1728
  %1730 = vmatmul.f32.gmra.mxu0 %v947
  %v1731 = vpop.f32.mrf.mxu0
  %v1732 = vadd.f32 %v307, %v1731
  %1733 = vmatmul.f32.gmra.mxu0 %v950
  %v1734 = vpop.f32.mrf.mxu0
  %v1735 = vadd.f32 %v307, %v1734
  %1736 = vmatmul.f32.gmra.mxu0 %v953
  %v1737 = vpop.f32.mrf.mxu0
  %v1738 = vadd.f32 %v307, %v1737
  %1739 = vmatmul.f32.gmra.mxu0 %v956
  %v1740 = vpop.f32.mrf.mxu0
  %v1741 = vadd.f32 %v307, %v1740
  %1742 = vmatmul.f32.gmra.mxu0 %v959
  %v1743 = vpop.f32.mrf.mxu0
  %v1744 = vadd.f32 %v307, %v1743
  %1745 = vmatmul.f32.gmra.mxu0 %v962
  %v1746 = vpop.f32.mrf.mxu0
  %v1747 = vadd.f32 %v307, %v1746
  %1748 = vmatmul.f32.gmra.mxu0 %v965
  %v1749 = vpop.f32.mrf.mxu0
  %v1750 = vadd.f32 %v307, %v1749
  %1751 = vmatmul.f32.gmra.mxu0 %v968
  %v1752 = vpop.f32.mrf.mxu0
  %v1753 = vadd.f32 %v307, %v1752
  %1754 = vmatmul.f32.gmra.mxu0 %v971
  %v1755 = vpop.f32.mrf.mxu0
  %v1756 = vadd.f32 %v307, %v1755
  %1757 = vmatmul.f32.gmra.mxu0 %v974
  %v1758 = vpop.f32.mrf.mxu0
  %v1759 = vadd.f32 %v307, %v1758
  %1760 = vmatmul.f32.gmra.mxu0 %v977
  %v1761 = vpop.f32.mrf.mxu0
  %v1762 = vadd.f32 %v307, %v1761
  %1763 = vmatmul.f32.gmra.mxu0 %v980
  %v1764 = vpop.f32.mrf.mxu0
  %v1765 = vadd.f32 %v307, %v1764
  %1766 = vmatmul.f32.gmra.mxu0 %v983
  %v1767 = vpop.f32.mrf.mxu0
  %v1768 = vadd.f32 %v307, %v1767
  %1769 = vmatmul.f32.gmra.mxu0 %v986
  %v1770 = vpop.f32.mrf.mxu0
  %v1771 = vadd.f32 %v307, %v1770
  %1772 = vmatmul.f32.gmra.mxu0 %v989
  %v1773 = vpop.f32.mrf.mxu0
  %v1774 = vadd.f32 %v307, %v1773
  %1775 = vmatmul.f32.gmra.mxu0 %v992
  %v1776 = vpop.f32.mrf.mxu0
  %v1777 = vadd.f32 %v307, %v1776
  %1778 = vmatmul.f32.gmra.mxu0 %v995
  %v1779 = vpop.f32.mrf.mxu0
  %v1780 = vadd.f32 %v307, %v1779
  %1781 = vmatmul.f32.gmra.mxu0 %v998
  %v1782 = vpop.f32.mrf.mxu0
  %v1783 = vadd.f32 %v307, %v1782
  %1784 = vmatmul.f32.gmra.mxu0 %v1001
  %v1785 = vpop.f32.mrf.mxu0
  %v1786 = vadd.f32 %v307, %v1785
  %1787 = vmatmul.f32.gmra.mxu0 %v1004
  %v1788 = vpop.f32.mrf.mxu0
  %v1789 = vadd.f32 %v307, %v1788
  %1790 = vmatmul.f32.gmra.mxu0 %v1007
  %v1791 = vpop.f32.mrf.mxu0
  %v1792 = vadd.f32 %v307, %v1791
  %1793 = vmatmul.f32.gmra.mxu0 %v1010
  %v1794 = vpop.f32.mrf.mxu0
  %v1795 = vadd.f32 %v307, %v1794
  %1796 = vmatmul.f32.gmra.mxu0 %v1013
  %v1797 = vpop.f32.mrf.mxu0
  %v1798 = vadd.f32 %v307, %v1797
  %1799 = vmatmul.f32.gmra.mxu0 %v1016
  %v1800 = vpop.f32.mrf.mxu0
  %v1801 = vadd.f32 %v307, %v1800
  %1802 = vmatmul.f32.gmra.mxu0 %v1019
  %v1803 = vpop.f32.mrf.mxu0
  %v1804 = vadd.f32 %v307, %v1803
  %1805 = vmatmul.f32.gmra.mxu0 %v1022
  %v1806 = vpop.f32.mrf.mxu0
  %v1807 = vadd.f32 %v307, %v1806
  %1808 = vmatmul.f32.gmra.mxu0 %v1025
  %v1809 = vpop.f32.mrf.mxu0
  %v1810 = vadd.f32 %v307, %v1809
  %1811 = vmatmul.f32.gmra.mxu0 %v1028
  %v1812 = vpop.f32.mrf.mxu0
  %v1813 = vadd.f32 %v307, %v1812
  %1814 = vmatmul.f32.gmra.mxu0 %v1031
  %v1815 = vpop.f32.mrf.mxu0
  %v1816 = vadd.f32 %v307, %v1815
  %1817 = vmatmul.f32.gmra.mxu0 %v1034
  %v1818 = vpop.f32.mrf.mxu0
  %v1819 = vadd.f32 %v307, %v1818
  %1820 = vmatmul.f32.gmra.mxu0 %v1037
  %v1821 = vpop.f32.mrf.mxu0
  %v1822 = vadd.f32 %v307, %v1821
  %1823 = vmatmul.f32.gmra.mxu0 %v1040
  %v1824 = vpop.f32.mrf.mxu0
  %v1825 = vadd.f32 %v307, %v1824
  %1826 = vmatmul.f32.gmra.mxu0 %v1043
  %v1827 = vpop.f32.mrf.mxu0
  %v1828 = vadd.f32 %v307, %v1827
  %1829 = vmatmul.f32.gmra.mxu0 %v1046
  %v1830 = vpop.f32.mrf.mxu0
  %v1831 = vadd.f32 %v307, %v1830
  %1832 = vmatmul.f32.gmra.mxu0 %v1049
  %v1833 = vpop.f32.mrf.mxu0
  %v1834 = vadd.f32 %v307, %v1833
  %1835 = vmatmul.f32.gmra.mxu0 %v1052
  %v1836 = vpop.f32.mrf.mxu0
  %v1837 = vadd.f32 %v307, %v1836
  %1838 = vmatmul.f32.gmra.mxu0 %v1055
  %v1839 = vpop.f32.mrf.mxu0
  %v1840 = vadd.f32 %v307, %v1839
  %1841 = vmatmul.f32.gmra.mxu0 %v1058
  %v1842 = vpop.f32.mrf.mxu0
  %v1843 = vadd.f32 %v307, %v1842
  %1844 = vmatmul.f32.gmra.mxu0 %v1061
  %v1845 = vpop.f32.mrf.mxu0
  %v1846 = vadd.f32 %v307, %v1845
  %1847 = vmatmul.f32.gmra.mxu0 %v1064
  %v1848 = vpop.f32.mrf.mxu0
  %v1849 = vadd.f32 %v307, %v1848
  %1850 = vmatmul.f32.gmra.mxu0 %v1067
  %v1851 = vpop.f32.mrf.mxu0
  %v1852 = vadd.f32 %v307, %v1851
  %1853 = vmatmul.f32.gmra.mxu0 %v1070
  %v1854 = vpop.f32.mrf.mxu0
  %v1855 = vadd.f32 %v307, %v1854
  %1856 = vmatmul.f32.gmra.mxu0 %v1073
  %v1857 = vpop.f32.mrf.mxu0
  %v1858 = vadd.f32 %v307, %v1857
  %1859 = vmatmul.f32.gmra.mxu0 %v1076
  %v1860 = vpop.f32.mrf.mxu0
  %v1861 = vadd.f32 %v307, %v1860
  %1862 = vdwg.mxu0
  %v1863 = vtanh.pop %v1096
  %v1864 = vtanh.pop %v1099
  %v1865 = vtanh.pop %v1102
  %v1866 = vtanh.pop %v1105
  %v1867 = vtanh.pop %v1108
  %v1868 = vtanh.pop %v1111
  %v1869 = vtanh.pop %v1114
  %v1870 = vtanh.pop %v1117
  %v1871 = vtanh.pop %v1120
  %v1872 = vtanh.pop %v1123
  %v1873 = vtanh.pop %v1126
  %v1874 = vtanh.pop %v1129
  %v1875 = vtanh.pop %v1132
  %v1876 = vtanh.pop %v1135
  %v1877 = vtanh.pop %v1138
  %v1878 = vtanh.pop %v1141
  %v1879 = vtanh.pop %v1144
  %v1880 = vtanh.pop %v1147
  %v1881 = vtanh.pop %v1150
  %v1882 = vtanh.pop %v1153
  %v1883 = vtanh.pop %v1156
  %v1884 = vtanh.pop %v1159
  %v1885 = vtanh.pop %v1162
  %v1886 = vtanh.pop %v1165
  %v1887 = vtanh.pop %v1168
  %v1888 = vtanh.pop %v1171
  %v1889 = vtanh.pop %v1174
  %v1890 = vtanh.pop %v1177
  %v1891 = vtanh.pop %v1180
  %v1892 = vtanh.pop %v1183
  %v1893 = vtanh.pop %v1186
  %v1894 = vtanh.pop %v1189
  %v1895 = vtanh.pop %v1192
  %v1896 = vtanh.pop %v1195
  %v1897 = vtanh.pop %v1198
  %v1898 = vtanh.pop %v1201
  %v1899 = vtanh.pop %v1204
  %v1900 = vtanh.pop %v1207
  %v1901 = vtanh.pop %v1210
  %v1902 = vtanh.pop %v1213
  %v1903 = vtanh.pop %v1216
  %v1904 = vtanh.pop %v1219
  %v1905 = vtanh.pop %v1222
  %v1906 = vtanh.pop %v1225
  %v1907 = vtanh.pop %v1228
  %v1908 = vtanh.pop %v1231
  %v1909 = vtanh.pop %v1234
  %v1910 = vtanh.pop %v1237
  %v1911 = vtanh.pop %v1240
  %v1912 = vtanh.pop %v1243
  %v1913 = vtanh.pop %v1246
  %v1914 = vtanh.pop %v1249
  %v1915 = vtanh.pop %v1252
  %v1916 = vtanh.pop %v1255
  %v1917 = vtanh.pop %v1258
  %v1918 = vtanh.pop %v1261
  %v1919 = vtanh.pop %v1264
  %v1920 = vtanh.pop %v1267
  %v1921 = vtanh.pop %v1270
  %v1922 = vtanh.pop %v1273
  %v1923 = vtanh.pop %v1276
  %v1924 = vtanh.pop %v1279
  %v1925 = vtanh.pop %v1282
  %v1926 = vtanh.pop %v1285
  %v1927 = vtanh.pop %v1288
  %v1928 = vtanh.pop %v1291
  %v1929 = vtanh.pop %v1294
  %v1930 = vtanh.pop %v1297
  %v1931 = vtanh.pop %v1300
  %v1932 = vtanh.pop %v1303
  %v1933 = vtanh.pop %v1306
  %v1934 = vtanh.pop %v1309
  %v1935 = vtanh.pop %v1312
  %v1936 = vtanh.pop %v1315
  %v1937 = vtanh.pop %v1318
  %v1938 = vtanh.pop %v1321
  %v1939 = vtanh.pop %v1324
  %v1940 = vtanh.pop %v1327
  %v1941 = vtanh.pop %v1330
  %v1942 = vtanh.pop %v1333
  %v1943 = vtanh.pop %v1336
  %v1944 = vtanh.pop %v1339
  %v1945 = vtanh.pop %v1342
  %v1946 = vtanh.pop %v1345
  %v1947 = vtanh.pop %v1348
  %v1948 = vtanh.pop %v1351
  %v1949 = vtanh.pop %v1354
  %v1950 = vtanh.pop %v1357
  %v1951 = vtanh.pop %v1360
  %v1952 = vtanh.pop %v1363
  %v1953 = vtanh.pop %v1366
  %v1954 = vtanh.pop %v1369
  %v1955 = vtanh.pop %v1372
  %v1956 = vtanh.pop %v1375
  %v1957 = vtanh.pop %v1378
  %v1958 = vtanh.pop %v1381
  %v1959 = vtanh.pop %v1384
  %v1960 = vtanh.pop %v1387
  %v1961 = vtanh.pop %v1390
  %v1962 = vtanh.pop %v1393
  %v1963 = vtanh.pop %v1396
  %v1964 = vtanh.pop %v1399
  %v1965 = vtanh.pop %v1402
  %v1966 = vtanh.pop %v1405
  %v1967 = vtanh.pop %v1408
  %v1968 = vtanh.pop %v1411
  %v1969 = vtanh.pop %v1414
  %v1970 = vtanh.pop %v1417
  %v1971 = vtanh.pop %v1420
  %v1972 = vtanh.pop %v1423
  %v1973 = vtanh.pop %v1426
  %v1974 = vtanh.pop %v1429
  %v1975 = vtanh.pop %v1432
  %v1976 = vtanh.pop %v1435
  %v1977 = vtanh.pop %v1438
  %v1978 = vtanh.pop %v1441
  %v1979 = vtanh.pop %v1444
  %v1980 = vtanh.pop %v1447
  %v1981 = vtanh.pop %v1450
  %v1982 = vtanh.pop %v1453
  %v1983 = vtanh.pop %v1456
  %v1984 = vtanh.pop %v1459
  %v1985 = vtanh.pop %v1462
  %v1986 = vtanh.pop %v1465
  %v1987 = vtanh.pop %v1468
  %v1988 = vtanh.pop %v1471
  %v1989 = vtanh.pop %v1474
  %v1990 = vtanh.pop %v1477
  %v1991 = vtanh.pop %v1480
  %v1992 = vtanh.pop %v1483
  %v1993 = vtanh.pop %v1486
  %v1994 = vtanh.pop %v1489
  %v1995 = vtanh.pop %v1492
  %v1996 = vtanh.pop %v1495
  %v1997 = vtanh.pop %v1498
  %v1998 = vtanh.pop %v1501
  %v1999 = vtanh.pop %v1504
  %v2000 = vtanh.pop %v1507
  %v2001 = vtanh.pop %v1510
  %v2002 = vtanh.pop %v1513
  %v2003 = vtanh.pop %v1516
  %v2004 = vtanh.pop %v1519
  %v2005 = vtanh.pop %v1522
  %v2006 = vtanh.pop %v1525
  %v2007 = vtanh.pop %v1528
  %v2008 = vtanh.pop %v1531
  %v2009 = vtanh.pop %v1534
  %v2010 = vtanh.pop %v1537
  %v2011 = vtanh.pop %v1540
  %v2012 = vtanh.pop %v1543
  %v2013 = vtanh.pop %v1546
  %v2014 = vtanh.pop %v1549
  %v2015 = vtanh.pop %v1552
  %v2016 = vtanh.pop %v1555
  %v2017 = vtanh.pop %v1558
  %v2018 = vtanh.pop %v1561
  %v2019 = vtanh.pop %v1564
  %v2020 = vtanh.pop %v1567
  %v2021 = vtanh.pop %v1570
  %v2022 = vtanh.pop %v1573
  %v2023 = vtanh.pop %v1576
  %v2024 = vtanh.pop %v1579
  %v2025 = vtanh.pop %v1582
  %v2026 = vtanh.pop %v1585
  %v2027 = vtanh.pop %v1588
  %v2028 = vtanh.pop %v1591
  %v2029 = vtanh.pop %v1594
  %v2030 = vtanh.pop %v1597
  %v2031 = vtanh.pop %v1600
  %v2032 = vtanh.pop %v1603
  %v2033 = vtanh.pop %v1606
  %v2034 = vtanh.pop %v1609
  %v2035 = vtanh.pop %v1612
  %v2036 = vtanh.pop %v1615
  %v2037 = vtanh.pop %v1618
  %v2038 = vtanh.pop %v1621
  %v2039 = vtanh.pop %v1624
  %v2040 = vtanh.pop %v1627
  %v2041 = vtanh.pop %v1630
  %v2042 = vtanh.pop %v1633
  %v2043 = vtanh.pop %v1636
  %v2044 = vtanh.pop %v1639
  %v2045 = vtanh.pop %v1642
  %v2046 = vtanh.pop %v1645
  %v2047 = vtanh.pop %v1648
  %v2048 = vtanh.pop %v1651
  %v2049 = vtanh.pop %v1654
  %v2050 = vtanh.pop %v1657
  %v2051 = vtanh.pop %v1660
  %v2052 = vtanh.pop %v1663
  %v2053 = vtanh.pop %v1666
  %v2054 = vtanh.pop %v1669
  %v2055 = vtanh.pop %v1672
  %v2056 = vtanh.pop %v1675
  %v2057 = vtanh.pop %v1678
  %v2058 = vtanh.pop %v1681
  %v2059 = vtanh.pop %v1684
  %v2060 = vtanh.pop %v1687
  %v2061 = vtanh.pop %v1690
  %v2062 = vtanh.pop %v1693
  %v2063 = vtanh.pop %v1696
  %v2064 = vtanh.pop %v1699
  %v2065 = vtanh.pop %v1702
  %v2066 = vtanh.pop %v1705
  %v2067 = vtanh.pop %v1708
  %v2068 = vtanh.pop %v1711
  %v2069 = vtanh.pop %v1714
  %v2070 = vtanh.pop %v1717
  %v2071 = vtanh.pop %v1720
  %v2072 = vtanh.pop %v1723
  %v2073 = vtanh.pop %v1726
  %v2074 = vtanh.pop %v1729
  %v2075 = vtanh.pop %v1732
  %v2076 = vtanh.pop %v1735
  %v2077 = vtanh.pop %v1738
  %v2078 = vtanh.pop %v1741
  %v2079 = vtanh.pop %v1744
  %v2080 = vtanh.pop %v1747
  %v2081 = vtanh.pop %v1750
  %v2082 = vtanh.pop %v1753
  %v2083 = vtanh.pop %v1756
  %v2084 = vtanh.pop %v1759
  %v2085 = vtanh.pop %v1762
  %v2086 = vtanh.pop %v1765
  %v2087 = vtanh.pop %v1768
  %v2088 = vtanh.pop %v1771
  %v2089 = vtanh.pop %v1774
  %v2090 = vtanh.pop %v1777
  %v2091 = vtanh.pop %v1780
  %v2092 = vtanh.pop %v1783
  %v2093 = vtanh.pop %v1786
  %v2094 = vtanh.pop %v1789
  %v2095 = vtanh.pop %v1792
  %v2096 = vtanh.pop %v1795
  %v2097 = vtanh.pop %v1798
  %v2098 = vtanh.pop %v1801
  %v2099 = vtanh.pop %v1804
  %v2100 = vtanh.pop %v1807
  %v2101 = vtanh.pop %v1810
  %v2102 = vtanh.pop %v1813
  %v2103 = vtanh.pop %v1816
  %v2104 = vtanh.pop %v1819
  %v2105 = vtanh.pop %v1822
  %v2106 = vtanh.pop %v1825
  %v2107 = vtanh.pop %v1828
  %v2108 = vtanh.pop %v1831
  %v2109 = vtanh.pop %v1834
  %v2110 = vtanh.pop %v1837
  %v2111 = vtanh.pop %v1840
  %v2112 = vtanh.pop %v1843
  %v2113 = vtanh.pop %v1846
  %v2114 = vtanh.pop %v1849
  %v2115 = vtanh.pop %v1852
  %v2116 = vtanh.pop %v1855
  %v2117 = vtanh.pop %v1858
  %v2118 = vtanh.pop %v1861
  %v2119 = vadd.f32 %v1863, %v1864
  %v2120 = vadd.f32 %v2119, %v1865
  %v2121 = vadd.f32 %v2120, %v1866
  %v2122 = vadd.f32 %v2121, %v1867
  %v2123 = vadd.f32 %v2122, %v1868
  %v2124 = vadd.f32 %v2123, %v1869
  %v2125 = vadd.f32 %v2124, %v1870
  %v2126 = vadd.f32 %v2125, %v1871
  %v2127 = vadd.f32 %v2126, %v1872
  %v2128 = vadd.f32 %v2127, %v1873
  %v2129 = vadd.f32 %v2128, %v1874
  %v2130 = vadd.f32 %v2129, %v1875
  %v2131 = vadd.f32 %v2130, %v1876
  %v2132 = vadd.f32 %v2131, %v1877
  %v2133 = vadd.f32 %v2132, %v1878
  %v2134 = vadd.f32 %v2133, %v1879
  %v2135 = vadd.f32 %v2134, %v1880
  %v2136 = vadd.f32 %v2135, %v1881
  %v2137 = vadd.f32 %v2136, %v1882
  %v2138 = vadd.f32 %v2137, %v1883
  %v2139 = vadd.f32 %v2138, %v1884
  %v2140 = vadd.f32 %v2139, %v1885
  %v2141 = vadd.f32 %v2140, %v1886
  %v2142 = vadd.f32 %v2141, %v1887
  %v2143 = vadd.f32 %v2142, %v1888
  %v2144 = vadd.f32 %v2143, %v1889
  %v2145 = vadd.f32 %v2144, %v1890
  %v2146 = vadd.f32 %v2145, %v1891
  %v2147 = vadd.f32 %v2146, %v1892
  %v2148 = vadd.f32 %v2147, %v1893
  %v2149 = vadd.f32 %v2148, %v1894
  %v2150 = vadd.f32 %v2149, %v1895
  %v2151 = vadd.f32 %v2150, %v1896
  %v2152 = vadd.f32 %v2151, %v1897
  %v2153 = vadd.f32 %v2152, %v1898
  %v2154 = vadd.f32 %v2153, %v1899
  %v2155 = vadd.f32 %v2154, %v1900
  %v2156 = vadd.f32 %v2155, %v1901
  %v2157 = vadd.f32 %v2156, %v1902
  %v2158 = vadd.f32 %v2157, %v1903
  %v2159 = vadd.f32 %v2158, %v1904
  %v2160 = vadd.f32 %v2159, %v1905
  %v2161 = vadd.f32 %v2160, %v1906
  %v2162 = vadd.f32 %v2161, %v1907
  %v2163 = vadd.f32 %v2162, %v1908
  %v2164 = vadd.f32 %v2163, %v1909
  %v2165 = vadd.f32 %v2164, %v1910
  %v2166 = vadd.f32 %v2165, %v1911
  %v2167 = vadd.f32 %v2166, %v1912
  %v2168 = vadd.f32 %v2167, %v1913
  %v2169 = vadd.f32 %v2168, %v1914
  %v2170 = vadd.f32 %v2169, %v1915
  %v2171 = vadd.f32 %v2170, %v1916
  %v2172 = vadd.f32 %v2171, %v1917
  %v2173 = vadd.f32 %v2172, %v1918
  %v2174 = vadd.f32 %v2173, %v1919
  %v2175 = vadd.f32 %v2174, %v1920
  %v2176 = vadd.f32 %v2175, %v1921
  %v2177 = vadd.f32 %v2176, %v1922
  %v2178 = vadd.f32 %v2177, %v1923
  %v2179 = vadd.f32 %v2178, %v1924
  %v2180 = vadd.f32 %v2179, %v1925
  %v2181 = vadd.f32 %v2180, %v1926
  %v2182 = vadd.f32 %v2181, %v1927
  %v2183 = vadd.f32 %v2182, %v1928
  %v2184 = vadd.f32 %v2183, %v1929
  %v2185 = vadd.f32 %v2184, %v1930
  %v2186 = vadd.f32 %v2185, %v1931
  %v2187 = vadd.f32 %v2186, %v1932
  %v2188 = vadd.f32 %v2187, %v1933
  %v2189 = vadd.f32 %v2188, %v1934
  %v2190 = vadd.f32 %v2189, %v1935
  %v2191 = vadd.f32 %v2190, %v1936
  %v2192 = vadd.f32 %v2191, %v1937
  %v2193 = vadd.f32 %v2192, %v1938
  %v2194 = vadd.f32 %v2193, %v1939
  %v2195 = vadd.f32 %v2194, %v1940
  %v2196 = vadd.f32 %v2195, %v1941
  %v2197 = vadd.f32 %v2196, %v1942
  %v2198 = vadd.f32 %v2197, %v1943
  %v2199 = vadd.f32 %v2198, %v1944
  %v2200 = vadd.f32 %v2199, %v1945
  %v2201 = vadd.f32 %v2200, %v1946
  %v2202 = vadd.f32 %v2201, %v1947
  %v2203 = vadd.f32 %v2202, %v1948
  %v2204 = vadd.f32 %v2203, %v1949
  %v2205 = vadd.f32 %v2204, %v1950
  %v2206 = vadd.f32 %v2205, %v1951
  %v2207 = vadd.f32 %v2206, %v1952
  %v2208 = vadd.f32 %v2207, %v1953
  %v2209 = vadd.f32 %v2208, %v1954
  %v2210 = vadd.f32 %v2209, %v1955
  %v2211 = vadd.f32 %v2210, %v1956
  %v2212 = vadd.f32 %v2211, %v1957
  %v2213 = vadd.f32 %v2212, %v1958
  %v2214 = vadd.f32 %v2213, %v1959
  %v2215 = vadd.f32 %v2214, %v1960
  %v2216 = vadd.f32 %v2215, %v1961
  %v2217 = vadd.f32 %v2216, %v1962
  %v2218 = vadd.f32 %v2217, %v1963
  %v2219 = vadd.f32 %v2218, %v1964
  %v2220 = vadd.f32 %v2219, %v1965
  %v2221 = vadd.f32 %v2220, %v1966
  %v2222 = vadd.f32 %v2221, %v1967
  %v2223 = vadd.f32 %v2222, %v1968
  %v2224 = vadd.f32 %v2223, %v1969
  %v2225 = vadd.f32 %v2224, %v1970
  %v2226 = vadd.f32 %v2225, %v1971
  %v2227 = vadd.f32 %v2226, %v1972
  %v2228 = vadd.f32 %v2227, %v1973
  %v2229 = vadd.f32 %v2228, %v1974
  %v2230 = vadd.f32 %v2229, %v1975
  %v2231 = vadd.f32 %v2230, %v1976
  %v2232 = vadd.f32 %v2231, %v1977
  %v2233 = vadd.f32 %v2232, %v1978
  %v2234 = vadd.f32 %v2233, %v1979
  %v2235 = vadd.f32 %v2234, %v1980
  %v2236 = vadd.f32 %v2235, %v1981
  %v2237 = vadd.f32 %v2236, %v1982
  %v2238 = vadd.f32 %v2237, %v1983
  %v2239 = vadd.f32 %v2238, %v1984
  %v2240 = vadd.f32 %v2239, %v1985
  %v2241 = vadd.f32 %v2240, %v1986
  %v2242 = vadd.f32 %v2241, %v1987
  %v2243 = vadd.f32 %v2242, %v1988
  %v2244 = vadd.f32 %v2243, %v1989
  %v2245 = vadd.f32 %v2244, %v1990
  %v2246 = vadd.f32 %v2245, %v1991
  %v2247 = vadd.f32 %v2246, %v1992
  %v2248 = vadd.f32 %v2247, %v1993
  %v2249 = vadd.f32 %v2248, %v1994
  %v2250 = vadd.f32 %v2249, %v1995
  %v2251 = vadd.f32 %v2250, %v1996
  %v2252 = vadd.f32 %v2251, %v1997
  %v2253 = vadd.f32 %v2252, %v1998
  %v2254 = vadd.f32 %v2253, %v1999
  %v2255 = vadd.f32 %v2254, %v2000
  %v2256 = vadd.f32 %v2255, %v2001
  %v2257 = vadd.f32 %v2256, %v2002
  %v2258 = vadd.f32 %v2257, %v2003
  %v2259 = vadd.f32 %v2258, %v2004
  %v2260 = vadd.f32 %v2259, %v2005
  %v2261 = vadd.f32 %v2260, %v2006
  %v2262 = vadd.f32 %v2261, %v2007
  %v2263 = vadd.f32 %v2262, %v2008
  %v2264 = vadd.f32 %v2263, %v2009
  %v2265 = vadd.f32 %v2264, %v2010
  %v2266 = vadd.f32 %v2265, %v2011
  %v2267 = vadd.f32 %v2266, %v2012
  %v2268 = vadd.f32 %v2267, %v2013
  %v2269 = vadd.f32 %v2268, %v2014
  %v2270 = vadd.f32 %v2269, %v2015
  %v2271 = vadd.f32 %v2270, %v2016
  %v2272 = vadd.f32 %v2271, %v2017
  %v2273 = vadd.f32 %v2272, %v2018
  %v2274 = vadd.f32 %v2273, %v2019
  %v2275 = vadd.f32 %v2274, %v2020
  %v2276 = vadd.f32 %v2275, %v2021
  %v2277 = vadd.f32 %v2276, %v2022
  %v2278 = vadd.f32 %v2277, %v2023
  %v2279 = vadd.f32 %v2278, %v2024
  %v2280 = vadd.f32 %v2279, %v2025
  %v2281 = vadd.f32 %v2280, %v2026
  %v2282 = vadd.f32 %v2281, %v2027
  %v2283 = vadd.f32 %v2282, %v2028
  %v2284 = vadd.f32 %v2283, %v2029
  %v2285 = vadd.f32 %v2284, %v2030
  %v2286 = vadd.f32 %v2285, %v2031
  %v2287 = vadd.f32 %v2286, %v2032
  %v2288 = vadd.f32 %v2287, %v2033
  %v2289 = vadd.f32 %v2288, %v2034
  %v2290 = vadd.f32 %v2289, %v2035
  %v2291 = vadd.f32 %v2290, %v2036
  %v2292 = vadd.f32 %v2291, %v2037
  %v2293 = vadd.f32 %v2292, %v2038
  %v2294 = vadd.f32 %v2293, %v2039
  %v2295 = vadd.f32 %v2294, %v2040
  %v2296 = vadd.f32 %v2295, %v2041
  %v2297 = vadd.f32 %v2296, %v2042
  %v2298 = vadd.f32 %v2297, %v2043
  %v2299 = vadd.f32 %v2298, %v2044
  %v2300 = vadd.f32 %v2299, %v2045
  %v2301 = vadd.f32 %v2300, %v2046
  %v2302 = vadd.f32 %v2301, %v2047
  %v2303 = vadd.f32 %v2302, %v2048
  %v2304 = vadd.f32 %v2303, %v2049
  %v2305 = vadd.f32 %v2304, %v2050
  %v2306 = vadd.f32 %v2305, %v2051
  %v2307 = vadd.f32 %v2306, %v2052
  %v2308 = vadd.f32 %v2307, %v2053
  %v2309 = vadd.f32 %v2308, %v2054
  %v2310 = vadd.f32 %v2309, %v2055
  %v2311 = vadd.f32 %v2310, %v2056
  %v2312 = vadd.f32 %v2311, %v2057
  %v2313 = vadd.f32 %v2312, %v2058
  %v2314 = vadd.f32 %v2313, %v2059
  %v2315 = vadd.f32 %v2314, %v2060
  %v2316 = vadd.f32 %v2315, %v2061
  %v2317 = vadd.f32 %v2316, %v2062
  %v2318 = vadd.f32 %v2317, %v2063
  %v2319 = vadd.f32 %v2318, %v2064
  %v2320 = vadd.f32 %v2319, %v2065
  %v2321 = vadd.f32 %v2320, %v2066
  %v2322 = vadd.f32 %v2321, %v2067
  %v2323 = vadd.f32 %v2322, %v2068
  %v2324 = vadd.f32 %v2323, %v2069
  %v2325 = vadd.f32 %v2324, %v2070
  %v2326 = vadd.f32 %v2325, %v2071
  %v2327 = vadd.f32 %v2326, %v2072
  %v2328 = vadd.f32 %v2327, %v2073
  %v2329 = vadd.f32 %v2328, %v2074
  %v2330 = vadd.f32 %v2329, %v2075
  %v2331 = vadd.f32 %v2330, %v2076
  %v2332 = vadd.f32 %v2331, %v2077
  %v2333 = vadd.f32 %v2332, %v2078
  %v2334 = vadd.f32 %v2333, %v2079
  %v2335 = vadd.f32 %v2334, %v2080
  %v2336 = vadd.f32 %v2335, %v2081
  %v2337 = vadd.f32 %v2336, %v2082
  %v2338 = vadd.f32 %v2337, %v2083
  %v2339 = vadd.f32 %v2338, %v2084
  %v2340 = vadd.f32 %v2339, %v2085
  %v2341 = vadd.f32 %v2340, %v2086
  %v2342 = vadd.f32 %v2341, %v2087
  %v2343 = vadd.f32 %v2342, %v2088
  %v2344 = vadd.f32 %v2343, %v2089
  %v2345 = vadd.f32 %v2344, %v2090
  %v2346 = vadd.f32 %v2345, %v2091
  %v2347 = vadd.f32 %v2346, %v2092
  %v2348 = vadd.f32 %v2347, %v2093
  %v2349 = vadd.f32 %v2348, %v2094
  %v2350 = vadd.f32 %v2349, %v2095
  %v2351 = vadd.f32 %v2350, %v2096
  %v2352 = vadd.f32 %v2351, %v2097
  %v2353 = vadd.f32 %v2352, %v2098
  %v2354 = vadd.f32 %v2353, %v2099
  %v2355 = vadd.f32 %v2354, %v2100
  %v2356 = vadd.f32 %v2355, %v2101
  %v2357 = vadd.f32 %v2356, %v2102
  %v2358 = vadd.f32 %v2357, %v2103
  %v2359 = vadd.f32 %v2358, %v2104
  %v2360 = vadd.f32 %v2359, %v2105
  %v2361 = vadd.f32 %v2360, %v2106
  %v2362 = vadd.f32 %v2361, %v2107
  %v2363 = vadd.f32 %v2362, %v2108
  %v2364 = vadd.f32 %v2363, %v2109
  %v2365 = vadd.f32 %v2364, %v2110
  %v2366 = vadd.f32 %v2365, %v2111
  %v2367 = vadd.f32 %v2366, %v2112
  %v2368 = vadd.f32 %v2367, %v2113
  %v2369 = vadd.f32 %v2368, %v2114
  %v2370 = vadd.f32 %v2369, %v2115
  %v2371 = vadd.f32 %v2370, %v2116
  %v2372 = vadd.f32 %v2371, %v2117
  %v2373 = vadd.f32 %v2372, %v2118
  %v2374 = vld [vmem:[%s3] sm:$0xff]
  %v2375 = vadd.f32 %v2374, %v2373
  %2376 = vst [vmem:[%s3] sm:$0xff] %v2375
  // Predicated region
  $region18: #{semantic_attention.2} parent=0 // pred_check
    _
  $region19: #{semantic_attention.2} parent=0 // pred_check_branch
    %2378 = sbr.rel (0) target = $region21
  $region20: #{semantic_attention.2} parent=0 // pred_region
    _
  $region21: #{semantic_attention.2} parent=0 // pred_fallthru
    _
  // Predicated region
  $region22: #{semantic_attention.2} parent=0 // pred_check
    _
  $region23: #{semantic_attention.2} parent=0 // pred_check_branch
    %2380 = sbr.rel (0) target = $region25
  $region24: #{semantic_attention.2} parent=0 // pred_region
    _
  $region25: #{semantic_attention.2} parent=0 // pred_fallthru
    _

</llo_original>
